<compile_context>
chip_gen: v7x
topology: tpu7x:2x2x1
jax: 0.10.0
libtpu: 0.0.40
codegen_flags: <defaults>
</compile_context>

<pallas_src>
from functools import partial

import jax
import jax.numpy as jnp
from jax.experimental import pallas as pl
from jax.experimental.pallas import tpu as pltpu

EPS = 1e-5       # nn.BatchNorm2d default eps
SLOPE = 0.01     # nn.LeakyReLU default negative_slope


def double_conv_kernel(xp_ref, band1_ref, bias1_ref, g1_ref, be1_ref,
                       band2_ref, bias2_ref, g2_ref, be2_ref, grp_ref,
                       out_ref, pad_ref,
                       *, N, H, W, C_out):
    """DoubleConv forward in a lane-dense (rows, W*C) layout.

    xp_ref    : (N, H+2, W*C_in)    vertically zero-padded input rows, (W,C) on lanes
    band*_ref : (3, W*C_*, W*C_out) banded conv weights, one per vertical tap dy
                (horizontal taps + horizontal zero padding folded in)
    bias*/g*/be* : (1, W*C_out)     conv bias / BN gamma / BN beta, tiled over W
    grp_ref   : (W*C_out, W*C_out)  G[i,j] = 1 iff lanes i,j hold the same channel
    out_ref   : (N*H, W*C_out)      lane-dense output rows
    pad_ref   : (N, H+2, W*C_out)   VMEM scratch, vertically padded intermediate
    """
    WC = W * C_out
    M = N * H
    inv_cnt = 1.0 / float(N * H * W)   # elements per channel

    def conv_rows(src_ref, band_ref):
        # 3x3 conv == 3 banded matmuls (one per dy); no window slicing along W.
        k = src_ref.shape[-1]
        acc = jnp.zeros((M, WC), jnp.float32)
        for dy in range(3):
            rows = src_ref[:, dy:dy + H, :].reshape(M, k)
            acc = acc + jnp.dot(rows, band_ref[dy],
                                preferred_element_type=jnp.float32)
        return acc

    def bn_lrelu(acc, bias_ref, g_ref, be_ref):
        acc = acc + bias_ref[...]
        # per-channel batch stats over N*H*W without leaving the lane-dense layout:
        # sublane reduce -> same-channel lane-group sum via matmul with G.
        col_sum = jnp.sum(acc, axis=0, keepdims=True)                    # (1, WC)
        mean = jnp.dot(col_sum, grp_ref[...],
                       preferred_element_type=jnp.float32) * inv_cnt     # (1, WC)
        d = acc - mean
        col_sq = jnp.sum(d * d, axis=0, keepdims=True)
        var = jnp.dot(col_sq, grp_ref[...],
                      preferred_element_type=jnp.float32) * inv_cnt      # biased var
        y = d * jax.lax.rsqrt(var + EPS) * g_ref[...] + be_ref[...]
        return jnp.where(y > 0, y, SLOPE * y)                            # LeakyReLU

    # ---- block 1: conv -> BN -> LeakyReLU ----
    y1 = bn_lrelu(conv_rows(xp_ref, band1_ref), bias1_ref, g1_ref, be1_ref)

    # vertical zero halo only (horizontal halo is folded into band2); no full fill.
    zrow = jnp.zeros((N, 1, WC), jnp.float32)
    pad_ref[:, 0:1, :] = zrow
    pad_ref[:, H + 1:H + 2, :] = zrow
    pad_ref[:, 1:H + 1, :] = y1.reshape(N, H, WC)

    # ---- block 2: conv -> BN -> LeakyReLU ----
    y2 = bn_lrelu(conv_rows(pad_ref, band2_ref), bias2_ref, g2_ref, be2_ref)
    out_ref[...] = y2                                                    # (N*H, WC)


def _band_weights(w, Wdim):
    """PyTorch conv weight (C_out, C_in, 3, 3) -> (3, Wdim*C_in, Wdim*C_out).

    band[dy, win*C_in + ci, wout*C_out + co] = w[co, ci, dy, dx] when
    win == wout + dx - 1 (and 0 otherwise) -- this folds the 3 horizontal taps
    and the padding=1 horizontal zero pad into a single matmul per dy.
    """
    w = w.astype(jnp.float32)
    bands = []
    for dy in range(3):
        b = jnp.zeros((Wdim * w.shape[1], Wdim * w.shape[0]), jnp.float32)
        for dx in range(3):
            shift_eye = jnp.eye(Wdim, k=1 - dx, dtype=jnp.float32)  # [win,wout]=1 iff win=wout+dx-1
            b = b + jnp.kron(shift_eye, w[:, :, dy, dx].T)
        bands.append(b)
    return jnp.stack(bands)


def double_conv(x_nchw, params):
    """PyTorch-compatible wrapper: NCHW in, NCHW out."""
    N, C_in, H, W = x_nchw.shape
    C_out = params['w1'].shape[0]
    WC = W * C_out

    # NCHW -> lane-packed rows (N, H, W*C_in), vertical zero pad only (glue).
    x_rows = jnp.transpose(x_nchw, (0, 2, 3, 1)).astype(jnp.float32).reshape(N, H, W * C_in)
    xp = jnp.pad(x_rows, ((0, 0), (1, 1), (0, 0)))

    band1 = _band_weights(params['w1'], W)      # (3, W*C_in,  W*C_out)
    band2 = _band_weights(params['w2'], W)      # (3, W*C_out, W*C_out)

    # per-channel vectors tiled over W so they broadcast on the lane axis.
    tile = lambda v: jnp.tile(v.astype(jnp.float32), W).reshape(1, WC)
    # same-channel lane-group matrix: G[i, j] = 1 iff i % C_out == j % C_out.
    grp = jnp.tile(jnp.eye(C_out, dtype=jnp.float32), (W, W))

    kernel = partial(double_conv_kernel, N=N, H=H, W=W, C_out=C_out)

    flops = 2 * N * H * 3 * (W * C_in * WC + WC * WC)
    bytes_accessed = 4 * (xp.size + band1.size + band2.size + grp.size
                          + 8 * WC + N * H * WC)
    cost = pl.CostEstimate(flops=flops, transcendentals=2 * WC,
                           bytes_accessed=bytes_accessed)

    out_rows = pl.pallas_call(
        kernel,
        out_shape=jax.ShapeDtypeStruct((N * H, WC), jnp.float32),
        in_specs=[pl.BlockSpec(memory_space=pltpu.MemorySpace.VMEM)] * 10,
        out_specs=pl.BlockSpec(memory_space=pltpu.MemorySpace.VMEM),
        scratch_shapes=[pltpu.VMEM((N, H + 2, WC), jnp.float32)],
        compiler_params=pltpu.CompilerParams(vmem_limit_bytes=32 * 1024 * 1024),
        cost_estimate=cost,
    )(xp,
      band1, tile(params['b1']), tile(params['g1']), tile(params['beta1']),
      band2, tile(params['b2']), tile(params['g2']), tile(params['beta2']),
      grp)

    # (N*H, W*C_out) -> NCHW
    return jnp.transpose(out_rows.reshape(N, H, W, C_out), (0, 3, 1, 2))


def reference(x, params):
    """Pure-JAX reference of the PyTorch forward (training-mode BN)."""
    def block(x, w, b, g, beta):
        y = jax.lax.conv_general_dilated(
            x, w, window_strides=(1, 1), padding='SAME',
            dimension_numbers=('NCHW', 'OIHW', 'NCHW'))
        y = y + b.reshape(1, -1, 1, 1)
        mean = jnp.mean(y, axis=(0, 2, 3), keepdims=True)
        var = jnp.mean((y - mean) ** 2, axis=(0, 2, 3), keepdims=True)
        y = (y - mean) / jnp.sqrt(var + EPS) * g.reshape(1, -1, 1, 1) \
            + beta.reshape(1, -1, 1, 1)
        return jnp.where(y > 0, y, SLOPE * y)

    y = block(x, params['w1'], params['b1'], params['g1'], params['beta1'])
    return block(y, params['w2'], params['b2'], params['g2'], params['beta2'])


if __name__ == "__main__":
    key = jax.random.PRNGKey(0)
    ks = jax.random.split(key, 9)
    N, C_in, C_out, H, W = 2, 4, 8, 16, 16

    x = jax.random.normal(ks[0], (N, C_in, H, W), jnp.float32)
    params = {
        'w1': 0.1 * jax.random.normal(ks[1], (C_out, C_in, 3, 3), jnp.float32),
        'b1': 0.1 * jax.random.normal(ks[2], (C_out,), jnp.float32),
        'g1': 1.0 + 0.1 * jax.random.normal(ks[3], (C_out,), jnp.float32),
        'beta1': 0.1 * jax.random.normal(ks[4], (C_out,), jnp.float32),
        'w2': 0.1 * jax.random.normal(ks[5], (C_out, C_out, 3, 3), jnp.float32),
        'b2': 0.1 * jax.random.normal(ks[6], (C_out,), jnp.float32),
        'g2': 1.0 + 0.1 * jax.random.normal(ks[7], (C_out,), jnp.float32),
        'beta2': 0.1 * jax.random.normal(ks[8], (C_out,), jnp.float32),
    }

    out = double_conv(x, params)
    jax.block_until_ready(out)

    assert out.shape == (N, C_out, H, W)
    ref = reference(x, params)
    max_err = jnp.max(jnp.abs(out - ref))
    assert jnp.allclose(out, ref, atol=2e-4, rtol=2e-4), f"max abs err {max_err}"
    print("KERNEL_OK")
</pallas_src>

<mosaic_0001>
module attributes {stable_mosaic.version = 11 : i64} {
  func.func @double_conv_kernel(%arg0: memref<2x18x64xf32, #tpu.memory_space<vmem>>, %arg1: memref<3x64x128xf32, #tpu.memory_space<vmem>>, %arg2: memref<1x128xf32, #tpu.memory_space<vmem>>, %arg3: memref<1x128xf32, #tpu.memory_space<vmem>>, %arg4: memref<1x128xf32, #tpu.memory_space<vmem>>, %arg5: memref<3x128x128xf32, #tpu.memory_space<vmem>>, %arg6: memref<1x128xf32, #tpu.memory_space<vmem>>, %arg7: memref<1x128xf32, #tpu.memory_space<vmem>>, %arg8: memref<1x128xf32, #tpu.memory_space<vmem>>, %arg9: memref<128x128xf32, #tpu.memory_space<vmem>>, %arg10: memref<32x128xf32, #tpu.memory_space<vmem>>, %arg11: memref<2x18x128xf32, #tpu.memory_space<vmem>>) attributes {dimension_semantics = [], scalar_prefetch = 0 : i64, scratch_operands = 1 : i64, tpu.core_type = #tpu.core_type<tc>} {
    %cst = arith.constant 0.000000e+00 : f32
    %0 = vector.broadcast %cst : f32 to vector<32x128xf32>
    %c0 = arith.constant 0 : index
    %c0_0 = arith.constant 0 : index
    %c0_1 = arith.constant 0 : index
    %1 = vector.load %arg0[%c0, %c0_0, %c0_1] : memref<2x18x64xf32, #tpu.memory_space<vmem>>, vector<2x16x64xf32>
    %2 = vector.shape_cast %1 : vector<2x16x64xf32> to vector<32x64xf32>
    %c0_2 = arith.constant 0 : index
    %c0_3 = arith.constant 0 : index
    %c0_4 = arith.constant 0 : index
    %3 = vector.load %arg1[%c0_2, %c0_3, %c0_4] : memref<3x64x128xf32, #tpu.memory_space<vmem>>, vector<1x64x128xf32>
    %4 = vector.shape_cast %3 : vector<1x64x128xf32> to vector<64x128xf32>
    %cst_5 = arith.constant dense<0.000000e+00> : vector<32x128xf32>
    %5 = tpu.matmul %2, %4, %cst_5 {dimension_numbers = #tpu.dot_dimension_numbers<[1], [0], [0], [1], [0, 0, 1, 1], [], []>} : vector<32x64xf32>, vector<64x128xf32>, vector<32x128xf32> -> vector<32x128xf32>
    %6 = arith.addf %0, %5 : vector<32x128xf32>
    %c0_6 = arith.constant 0 : index
    %c1 = arith.constant 1 : index
    %c0_7 = arith.constant 0 : index
    %7 = vector.load %arg0[%c0_6, %c1, %c0_7] : memref<2x18x64xf32, #tpu.memory_space<vmem>>, vector<2x16x64xf32>
    %8 = vector.shape_cast %7 : vector<2x16x64xf32> to vector<32x64xf32>
    %c1_8 = arith.constant 1 : index
    %c0_9 = arith.constant 0 : index
    %c0_10 = arith.constant 0 : index
    %9 = vector.load %arg1[%c1_8, %c0_9, %c0_10] : memref<3x64x128xf32, #tpu.memory_space<vmem>>, vector<1x64x128xf32>
    %10 = vector.shape_cast %9 : vector<1x64x128xf32> to vector<64x128xf32>
    %cst_11 = arith.constant dense<0.000000e+00> : vector<32x128xf32>
    %11 = tpu.matmul %8, %10, %cst_11 {dimension_numbers = #tpu.dot_dimension_numbers<[1], [0], [0], [1], [0, 0, 1, 1], [], []>} : vector<32x64xf32>, vector<64x128xf32>, vector<32x128xf32> -> vector<32x128xf32>
    %12 = arith.addf %6, %11 : vector<32x128xf32>
    %c0_12 = arith.constant 0 : index
    %c2 = arith.constant 2 : index
    %c0_13 = arith.constant 0 : index
    %13 = vector.load %arg0[%c0_12, %c2, %c0_13] : memref<2x18x64xf32, #tpu.memory_space<vmem>>, vector<2x16x64xf32>
    %14 = vector.shape_cast %13 : vector<2x16x64xf32> to vector<32x64xf32>
    %c2_14 = arith.constant 2 : index
    %c0_15 = arith.constant 0 : index
    %c0_16 = arith.constant 0 : index
    %15 = vector.load %arg1[%c2_14, %c0_15, %c0_16] : memref<3x64x128xf32, #tpu.memory_space<vmem>>, vector<1x64x128xf32>
    %16 = vector.shape_cast %15 : vector<1x64x128xf32> to vector<64x128xf32>
    %cst_17 = arith.constant dense<0.000000e+00> : vector<32x128xf32>
    %17 = tpu.matmul %14, %16, %cst_17 {dimension_numbers = #tpu.dot_dimension_numbers<[1], [0], [0], [1], [0, 0, 1, 1], [], []>} : vector<32x64xf32>, vector<64x128xf32>, vector<32x128xf32> -> vector<32x128xf32>
    %18 = arith.addf %12, %17 : vector<32x128xf32>
    %c0_18 = arith.constant 0 : index
    %c0_19 = arith.constant 0 : index
    %19 = vector.load %arg2[%c0_18, %c0_19] : memref<1x128xf32, #tpu.memory_space<vmem>>, vector<1x128xf32>
    %20 = vector.broadcast %19 : vector<1x128xf32> to vector<32x128xf32>
    %21 = arith.addf %18, %20 : vector<32x128xf32>
    %cst_20 = arith.constant dense<0.000000e+00> : vector<128xf32>
    %22 = vector.multi_reduction <add>, %21, %cst_20 [0] : vector<32x128xf32> to vector<128xf32>
    %23 = vector.shape_cast %22 : vector<128xf32> to vector<1x128xf32>
    %c0_21 = arith.constant 0 : index
    %c0_22 = arith.constant 0 : index
    %24 = vector.load %arg9[%c0_21, %c0_22] : memref<128x128xf32, #tpu.memory_space<vmem>>, vector<128x128xf32>
    %cst_23 = arith.constant dense<0.000000e+00> : vector<1x128xf32>
    %25 = tpu.matmul %23, %24, %cst_23 {dimension_numbers = #tpu.dot_dimension_numbers<[1], [0], [0], [1], [0, 0, 1, 1], [], []>} : vector<1x128xf32>, vector<128x128xf32>, vector<1x128xf32> -> vector<1x128xf32>
    %cst_24 = arith.constant 0.001953125 : f32
    %26 = vector.broadcast %cst_24 : f32 to vector<1x128xf32>
    %27 = arith.mulf %25, %26 : vector<1x128xf32>
    %28 = vector.broadcast %27 : vector<1x128xf32> to vector<32x128xf32>
    %29 = arith.subf %21, %28 : vector<32x128xf32>
    %30 = arith.mulf %29, %29 : vector<32x128xf32>
    %cst_25 = arith.constant dense<0.000000e+00> : vector<128xf32>
    %31 = vector.multi_reduction <add>, %30, %cst_25 [0] : vector<32x128xf32> to vector<128xf32>
    %32 = vector.shape_cast %31 : vector<128xf32> to vector<1x128xf32>
    %c0_26 = arith.constant 0 : index
    %c0_27 = arith.constant 0 : index
    %33 = vector.load %arg9[%c0_26, %c0_27] : memref<128x128xf32, #tpu.memory_space<vmem>>, vector<128x128xf32>
    %cst_28 = arith.constant dense<0.000000e+00> : vector<1x128xf32>
    %34 = tpu.matmul %32, %33, %cst_28 {dimension_numbers = #tpu.dot_dimension_numbers<[1], [0], [0], [1], [0, 0, 1, 1], [], []>} : vector<1x128xf32>, vector<128x128xf32>, vector<1x128xf32> -> vector<1x128xf32>
    %cst_29 = arith.constant 0.001953125 : f32
    %35 = vector.broadcast %cst_29 : f32 to vector<1x128xf32>
    %36 = arith.mulf %34, %35 : vector<1x128xf32>
    %cst_30 = arith.constant 9.99999974E-6 : f32
    %37 = vector.broadcast %cst_30 : f32 to vector<1x128xf32>
    %38 = arith.addf %36, %37 : vector<1x128xf32>
    %39 = math.rsqrt %38 : vector<1x128xf32>
    %40 = vector.broadcast %39 : vector<1x128xf32> to vector<32x128xf32>
    %41 = arith.mulf %29, %40 : vector<32x128xf32>
    %c0_31 = arith.constant 0 : index
    %c0_32 = arith.constant 0 : index
    %42 = vector.load %arg3[%c0_31, %c0_32] : memref<1x128xf32, #tpu.memory_space<vmem>>, vector<1x128xf32>
    %43 = vector.broadcast %42 : vector<1x128xf32> to vector<32x128xf32>
    %44 = arith.mulf %41, %43 : vector<32x128xf32>
    %c0_33 = arith.constant 0 : index
    %c0_34 = arith.constant 0 : index
    %45 = vector.load %arg4[%c0_33, %c0_34] : memref<1x128xf32, #tpu.memory_space<vmem>>, vector<1x128xf32>
    %46 = vector.broadcast %45 : vector<1x128xf32> to vector<32x128xf32>
    %47 = arith.addf %44, %46 : vector<32x128xf32>
    %cst_35 = arith.constant 0.000000e+00 : f32
    %48 = vector.broadcast %cst_35 : f32 to vector<32x128xf32>
    %49 = arith.cmpf ogt, %47, %48 : vector<32x128xf32>
    %cst_36 = arith.constant 0.00999999977 : f32
    %50 = vector.broadcast %cst_36 : f32 to vector<32x128xf32>
    %51 = arith.mulf %50, %47 : vector<32x128xf32>
    %52 = arith.select %49, %47, %51 : vector<32x128xi1>, vector<32x128xf32>
    %cst_37 = arith.constant 0.000000e+00 : f32
    %53 = vector.broadcast %cst_37 : f32 to vector<2x1x128xf32>
    %c0_38 = arith.constant 0 : index
    %c0_39 = arith.constant 0 : index
    %c0_40 = arith.constant 0 : index
    %54 = vector.load %arg11[%c0_38, %c0_39, %c0_40] : memref<2x18x128xf32, #tpu.memory_space<vmem>>, vector<2x1x128xf32>
    tpu.vector_store %arg11[%c0_38, %c0_39, %c0_40], %53 {strides = array<i32>} : memref<2x18x128xf32, #tpu.memory_space<vmem>>, vector<2x1x128xf32>,
    %c0_41 = arith.constant 0 : index
    %c17 = arith.constant 17 : index
    %c0_42 = arith.constant 0 : index
    %55 = vector.load %arg11[%c0_41, %c17, %c0_42] : memref<2x18x128xf32, #tpu.memory_space<vmem>>, vector<2x1x128xf32>
    tpu.vector_store %arg11[%c0_41, %c17, %c0_42], %53 {strides = array<i32>} : memref<2x18x128xf32, #tpu.memory_space<vmem>>, vector<2x1x128xf32>,
    %56 = vector.shape_cast %52 : vector<32x128xf32> to vector<2x16x128xf32>
    %c0_43 = arith.constant 0 : index
    %c1_44 = arith.constant 1 : index
    %c0_45 = arith.constant 0 : index
    %57 = vector.load %arg11[%c0_43, %c1_44, %c0_45] : memref<2x18x128xf32, #tpu.memory_space<vmem>>, vector<2x16x128xf32>
    tpu.vector_store %arg11[%c0_43, %c1_44, %c0_45], %56 {strides = array<i32>} : memref<2x18x128xf32, #tpu.memory_space<vmem>>, vector<2x16x128xf32>,
    %cst_46 = arith.constant 0.000000e+00 : f32
    %58 = vector.broadcast %cst_46 : f32 to vector<32x128xf32>
    %c0_47 = arith.constant 0 : index
    %c0_48 = arith.constant 0 : index
    %c0_49 = arith.constant 0 : index
    %59 = vector.load %arg11[%c0_47, %c0_48, %c0_49] : memref<2x18x128xf32, #tpu.memory_space<vmem>>, vector<2x16x128xf32>
    %60 = vector.shape_cast %59 : vector<2x16x128xf32> to vector<32x128xf32>
    %c0_50 = arith.constant 0 : index
    %c0_51 = arith.constant 0 : index
    %c0_52 = arith.constant 0 : index
    %61 = vector.load %arg5[%c0_50, %c0_51, %c0_52] : memref<3x128x128xf32, #tpu.memory_space<vmem>>, vector<1x128x128xf32>
    %62 = vector.shape_cast %61 : vector<1x128x128xf32> to vector<128x128xf32>
    %cst_53 = arith.constant dense<0.000000e+00> : vector<32x128xf32>
    %63 = tpu.matmul %60, %62, %cst_53 {dimension_numbers = #tpu.dot_dimension_numbers<[1], [0], [0], [1], [0, 0, 1, 1], [], []>} : vector<32x128xf32>, vector<128x128xf32>, vector<32x128xf32> -> vector<32x128xf32>
    %64 = arith.addf %58, %63 : vector<32x128xf32>
    %c0_54 = arith.constant 0 : index
    %c1_55 = arith.constant 1 : index
    %c0_56 = arith.constant 0 : index
    %65 = vector.load %arg11[%c0_54, %c1_55, %c0_56] : memref<2x18x128xf32, #tpu.memory_space<vmem>>, vector<2x16x128xf32>
    %66 = vector.shape_cast %65 : vector<2x16x128xf32> to vector<32x128xf32>
    %c1_57 = arith.constant 1 : index
    %c0_58 = arith.constant 0 : index
    %c0_59 = arith.constant 0 : index
    %67 = vector.load %arg5[%c1_57, %c0_58, %c0_59] : memref<3x128x128xf32, #tpu.memory_space<vmem>>, vector<1x128x128xf32>
    %68 = vector.shape_cast %67 : vector<1x128x128xf32> to vector<128x128xf32>
    %cst_60 = arith.constant dense<0.000000e+00> : vector<32x128xf32>
    %69 = tpu.matmul %66, %68, %cst_60 {dimension_numbers = #tpu.dot_dimension_numbers<[1], [0], [0], [1], [0, 0, 1, 1], [], []>} : vector<32x128xf32>, vector<128x128xf32>, vector<32x128xf32> -> vector<32x128xf32>
    %70 = arith.addf %64, %69 : vector<32x128xf32>
    %c0_61 = arith.constant 0 : index
    %c2_62 = arith.constant 2 : index
    %c0_63 = arith.constant 0 : index
    %71 = vector.load %arg11[%c0_61, %c2_62, %c0_63] : memref<2x18x128xf32, #tpu.memory_space<vmem>>, vector<2x16x128xf32>
    %72 = vector.shape_cast %71 : vector<2x16x128xf32> to vector<32x128xf32>
    %c2_64 = arith.constant 2 : index
    %c0_65 = arith.constant 0 : index
    %c0_66 = arith.constant 0 : index
    %73 = vector.load %arg5[%c2_64, %c0_65, %c0_66] : memref<3x128x128xf32, #tpu.memory_space<vmem>>, vector<1x128x128xf32>
    %74 = vector.shape_cast %73 : vector<1x128x128xf32> to vector<128x128xf32>
    %cst_67 = arith.constant dense<0.000000e+00> : vector<32x128xf32>
    %75 = tpu.matmul %72, %74, %cst_67 {dimension_numbers = #tpu.dot_dimension_numbers<[1], [0], [0], [1], [0, 0, 1, 1], [], []>} : vector<32x128xf32>, vector<128x128xf32>, vector<32x128xf32> -> vector<32x128xf32>
    %76 = arith.addf %70, %75 : vector<32x128xf32>
    %c0_68 = arith.constant 0 : index
    %c0_69 = arith.constant 0 : index
    %77 = vector.load %arg6[%c0_68, %c0_69] : memref<1x128xf32, #tpu.memory_space<vmem>>, vector<1x128xf32>
    %78 = vector.broadcast %77 : vector<1x128xf32> to vector<32x128xf32>
    %79 = arith.addf %76, %78 : vector<32x128xf32>
    %cst_70 = arith.constant dense<0.000000e+00> : vector<128xf32>
    %80 = vector.multi_reduction <add>, %79, %cst_70 [0] : vector<32x128xf32> to vector<128xf32>
    %81 = vector.shape_cast %80 : vector<128xf32> to vector<1x128xf32>
    %c0_71 = arith.constant 0 : index
    %c0_72 = arith.constant 0 : index
    %82 = vector.load %arg9[%c0_71, %c0_72] : memref<128x128xf32, #tpu.memory_space<vmem>>, vector<128x128xf32>
    %cst_73 = arith.constant dense<0.000000e+00> : vector<1x128xf32>
    %83 = tpu.matmul %81, %82, %cst_73 {dimension_numbers = #tpu.dot_dimension_numbers<[1], [0], [0], [1], [0, 0, 1, 1], [], []>} : vector<1x128xf32>, vector<128x128xf32>, vector<1x128xf32> -> vector<1x128xf32>
    %cst_74 = arith.constant 0.001953125 : f32
    %84 = vector.broadcast %cst_74 : f32 to vector<1x128xf32>
    %85 = arith.mulf %83, %84 : vector<1x128xf32>
    %86 = vector.broadcast %85 : vector<1x128xf32> to vector<32x128xf32>
    %87 = arith.subf %79, %86 : vector<32x128xf32>
    %88 = arith.mulf %87, %87 : vector<32x128xf32>
    %cst_75 = arith.constant dense<0.000000e+00> : vector<128xf32>
    %89 = vector.multi_reduction <add>, %88, %cst_75 [0] : vector<32x128xf32> to vector<128xf32>
    %90 = vector.shape_cast %89 : vector<128xf32> to vector<1x128xf32>
    %c0_76 = arith.constant 0 : index
    %c0_77 = arith.constant 0 : index
    %91 = vector.load %arg9[%c0_76, %c0_77] : memref<128x128xf32, #tpu.memory_space<vmem>>, vector<128x128xf32>
    %cst_78 = arith.constant dense<0.000000e+00> : vector<1x128xf32>
    %92 = tpu.matmul %90, %91, %cst_78 {dimension_numbers = #tpu.dot_dimension_numbers<[1], [0], [0], [1], [0, 0, 1, 1], [], []>} : vector<1x128xf32>, vector<128x128xf32>, vector<1x128xf32> -> vector<1x128xf32>
    %cst_79 = arith.constant 0.001953125 : f32
    %93 = vector.broadcast %cst_79 : f32 to vector<1x128xf32>
    %94 = arith.mulf %92, %93 : vector<1x128xf32>
    %cst_80 = arith.constant 9.99999974E-6 : f32
    %95 = vector.broadcast %cst_80 : f32 to vector<1x128xf32>
    %96 = arith.addf %94, %95 : vector<1x128xf32>
    %97 = math.rsqrt %96 : vector<1x128xf32>
    %98 = vector.broadcast %97 : vector<1x128xf32> to vector<32x128xf32>
    %99 = arith.mulf %87, %98 : vector<32x128xf32>
    %c0_81 = arith.constant 0 : index
    %c0_82 = arith.constant 0 : index
    %100 = vector.load %arg7[%c0_81, %c0_82] : memref<1x128xf32, #tpu.memory_space<vmem>>, vector<1x128xf32>
    %101 = vector.broadcast %100 : vector<1x128xf32> to vector<32x128xf32>
    %102 = arith.mulf %99, %101 : vector<32x128xf32>
    %c0_83 = arith.constant 0 : index
    %c0_84 = arith.constant 0 : index
    %103 = vector.load %arg8[%c0_83, %c0_84] : memref<1x128xf32, #tpu.memory_space<vmem>>, vector<1x128xf32>
    %104 = vector.broadcast %103 : vector<1x128xf32> to vector<32x128xf32>
    %105 = arith.addf %102, %104 : vector<32x128xf32>
    %cst_85 = arith.constant 0.000000e+00 : f32
    %106 = vector.broadcast %cst_85 : f32 to vector<32x128xf32>
    %107 = arith.cmpf ogt, %105, %106 : vector<32x128xf32>
    %cst_86 = arith.constant 0.00999999977 : f32
    %108 = vector.broadcast %cst_86 : f32 to vector<32x128xf32>
    %109 = arith.mulf %108, %105 : vector<32x128xf32>
    %110 = arith.select %107, %105, %109 : vector<32x128xi1>, vector<32x128xf32>
    %c0_87 = arith.constant 0 : index
    %c0_88 = arith.constant 0 : index
    %111 = vector.load %arg10[%c0_87, %c0_88] : memref<32x128xf32, #tpu.memory_space<vmem>>, vector<32x128xf32>
    tpu.vector_store %arg10[%c0_87, %c0_88], %110 {strides = array<i32>} : memref<32x128xf32, #tpu.memory_space<vmem>>, vector<32x128xf32>,
    return
  }
}

</mosaic_0001>

<llo_original>
// kernel: tpu_custom_call.1
$region0: #{tpu_custom_call.1}
  #allocation0 [shape = 'u32[]', space=smem, size = 0x4, offset = 0x4, fixed_abs, tag = 'smem constant byte address 0x4 - core index']
  #allocation1 [shape = 'u32[144,128]{1,0:T(1,128)}', space=vmem, size = 0x12000, scoped, tag = 'internal scratch']
  #allocation2 [shape = 'f32[2,18,128]{2,1,0:T(8,128)}', space=vmem, size = 0x6000, scoped, tag = 'scratch operand']
  %s0 = inlined_call_operand.vmem [shape: f32[2,18,64], index: 0, kind: input, shape index: {}]
  %s1 = inlined_call_operand.hbm [shape: f32[3,64,128], index: 1, kind: input, shape index: {}]
  %s2 = inlined_call_operand.vmem [shape: f32[1,128], index: 2, kind: input, shape index: {}]
  %s3 = inlined_call_operand.vmem [shape: f32[1,128], index: 3, kind: input, shape index: {}]
  %s4 = inlined_call_operand.vmem [shape: f32[1,128], index: 4, kind: input, shape index: {}]
  %s5 = inlined_call_operand.hbm [shape: f32[3,128,128], index: 5, kind: input, shape index: {}]
  %s6 = inlined_call_operand.vmem [shape: f32[1,128], index: 6, kind: input, shape index: {}]
  %s7 = inlined_call_operand.vmem [shape: f32[1,128], index: 7, kind: input, shape index: {}]
  %s8 = inlined_call_operand.vmem [shape: f32[1,128], index: 8, kind: input, shape index: {}]
  %s9 = inlined_call_operand.hbm [shape: f32[128,128], index: 9, kind: input, shape index: {}]
  %s10 = inlined_call_operand.hbm [shape: f32[32,128], index: 10, kind: output, shape index: {}]
  %s11 = sld [smem:[#allocation0]]
  $region62: #{tpu_custom_call.1} parent=0
    _
  %s13 = ssub.s32 1, %s11
  %s14 = scalar_select 0, %s13, %s11
  $region1: #{tpu_custom_call.1} parent=0
    #allocation3 [shape = 'u8[98304]{0}', space=vmem, size = 0x18000, scoped, tag = 'input window, operand 1, single buffered']
    #allocation4 [shape = 's32[1]{0}', space=sflag, size = 0x4, scoped, tag = 'scoped memory for tpu_custom_call.1']
    #allocation5 [shape = 's32[1]{0}', space=sflag, size = 0x4, scoped, tag = 'scoped memory for tpu_custom_call.1']
    #allocation6 [shape = 'u8[196608]{0}', space=vmem, size = 0x30000, scoped, tag = 'input window, operand 5, single buffered']
    #allocation7 [shape = 's32[1]{0}', space=sflag, size = 0x4, scoped, tag = 'scoped memory for tpu_custom_call.1']
    #allocation8 [shape = 'u8[65536]{0}', space=vmem, size = 0x10000, scoped, tag = 'input window, operand 9, single buffered']
    #allocation9 [shape = 'u8[16384]{0}', space=vmem, size = 0x4000, scoped, tag = 'output window, operand 0, single buffered']
    %15 = vsyncpa [#allocation4], 0
    %16 = vsyncpa [#allocation7], 0
    %17 = vsyncpa [#allocation5], 0
    // Predicated region
    $region2: #{tpu_custom_call.1} parent=1 // pred_check
      _
    $region3: #{tpu_custom_call.1} parent=1 // pred_check_branch
      %19 = sbr.rel (0) target = $region5
    $region4: #{tpu_custom_call.1} parent=1 // pred_region
      _
    $region5: #{tpu_custom_call.1} parent=1 // pred_fallthru
      _
    // Predicated region
    $region6: #{tpu_custom_call.1} parent=1 // pred_check
      _
    $region7: #{tpu_custom_call.1} parent=1 // pred_check_branch
      %21 = sbr.rel (0) target = $region9
    $region8: #{tpu_custom_call.1} parent=1 // pred_region
      %s23 = ssub.s32 3072, 3072
      %24 = vsyncadd [#allocation4], %s23
      %s25 = sshll.u32 [#allocation3], 4
      %s26 = int_to_ptr.vmem [resolvable:$true] %s25
      %31 = dma.hbm_to_vmem [thread:$0]  %s1, 3072, %s26, [#allocation4], 128, 128, 8
    $region9: #{tpu_custom_call.1} parent=1 // pred_fallthru
      _
    // Predicated region
    $region10: #{tpu_custom_call.1} parent=1 // pred_check
      _
    $region11: #{tpu_custom_call.1} parent=1 // pred_check_branch
      %33 = sbr.rel (0) target = $region13
    $region12: #{tpu_custom_call.1} parent=1 // pred_region
      _
    $region13: #{tpu_custom_call.1} parent=1 // pred_fallthru
      _
    // Predicated region
    $region14: #{tpu_custom_call.1} parent=1 // pred_check
      _
    $region15: #{tpu_custom_call.1} parent=1 // pred_check_branch
      %35 = sbr.rel (0) target = $region17
    $region16: #{tpu_custom_call.1} parent=1 // pred_region
      _
    $region17: #{tpu_custom_call.1} parent=1 // pred_fallthru
      _
    // Predicated region
    $region18: #{tpu_custom_call.1} parent=1 // pred_check
      _
    $region19: #{tpu_custom_call.1} parent=1 // pred_check_branch
      %37 = sbr.rel (0) target = $region21
    $region20: #{tpu_custom_call.1} parent=1 // pred_region
      _
    $region21: #{tpu_custom_call.1} parent=1 // pred_fallthru
      _
    // Predicated region
    $region22: #{tpu_custom_call.1} parent=1 // pred_check
      _
    $region23: #{tpu_custom_call.1} parent=1 // pred_check_branch
      %39 = sbr.rel (0) target = $region25
    $region24: #{tpu_custom_call.1} parent=1 // pred_region
      %s41 = ssub.s32 6144, 6144
      %42 = vsyncadd [#allocation7], %s41
      %s43 = sshll.u32 [#allocation6], 4
      %s44 = int_to_ptr.vmem [resolvable:$true] %s43
      %49 = dma.hbm_to_vmem [thread:$0]  %s5, 6144, %s44, [#allocation7], 128, 128, 8
    $region25: #{tpu_custom_call.1} parent=1 // pred_fallthru
      _
    // Predicated region
    $region26: #{tpu_custom_call.1} parent=1 // pred_check
      _
    $region27: #{tpu_custom_call.1} parent=1 // pred_check_branch
      %51 = sbr.rel (0) target = $region29
    $region28: #{tpu_custom_call.1} parent=1 // pred_region
      _
    $region29: #{tpu_custom_call.1} parent=1 // pred_fallthru
      _
    // Predicated region
    $region30: #{tpu_custom_call.1} parent=1 // pred_check
      _
    $region31: #{tpu_custom_call.1} parent=1 // pred_check_branch
      %53 = sbr.rel (0) target = $region33
    $region32: #{tpu_custom_call.1} parent=1 // pred_region
      _
    $region33: #{tpu_custom_call.1} parent=1 // pred_fallthru
      _
    // Predicated region
    $region34: #{tpu_custom_call.1} parent=1 // pred_check
      _
    $region35: #{tpu_custom_call.1} parent=1 // pred_check_branch
      %55 = sbr.rel (0) target = $region37
    $region36: #{tpu_custom_call.1} parent=1 // pred_region
      _
    $region37: #{tpu_custom_call.1} parent=1 // pred_fallthru
      _
    // Predicated region
    $region38: #{tpu_custom_call.1} parent=1 // pred_check
      _
    $region39: #{tpu_custom_call.1} parent=1 // pred_check_branch
      %57 = sbr.rel (0) target = $region41
    $region40: #{tpu_custom_call.1} parent=1 // pred_region
      %s59 = ssub.s32 2048, 2048
      %60 = vsyncadd [#allocation7], %s59
      %s61 = sshll.u32 [#allocation8], 4
      %s62 = int_to_ptr.vmem [resolvable:$true] %s61
      %67 = dma.hbm_to_vmem [thread:$0]  %s9, 2048, %s62, [#allocation7], 128, 128, 8
    $region41: #{tpu_custom_call.1} parent=1 // pred_fallthru
      _
    // Predicated region
    $region42: #{tpu_custom_call.1} parent=1 // pred_check
      _
    $region43: #{tpu_custom_call.1} parent=1 // pred_check_branch
      %69 = sbr.rel (0) target = $region45
    $region44: #{tpu_custom_call.1} parent=1 // pred_region
      %70 = dma.done [#allocation4], 3072
    $region45: #{tpu_custom_call.1} parent=1 // pred_fallthru
      _
    // Predicated region
    $region46: #{tpu_custom_call.1} parent=1 // pred_check
      _
    $region47: #{tpu_custom_call.1} parent=1 // pred_check_branch
      %72 = sbr.rel (0) target = $region49
    $region48: #{tpu_custom_call.1} parent=1 // pred_region
      %73 = dma.done [#allocation7], 6144
    $region49: #{tpu_custom_call.1} parent=1 // pred_fallthru
      _
    // Predicated region
    $region50: #{tpu_custom_call.1} parent=1 // pred_check
      _
    $region51: #{tpu_custom_call.1} parent=1 // pred_check_branch
      %75 = sbr.rel (0) target = $region53
    $region52: #{tpu_custom_call.1} parent=1 // pred_region
      %76 = dma.done [#allocation7], 2048
    $region53: #{tpu_custom_call.1} parent=1 // pred_fallthru
      _
    %v77 = vld [vmem:[%s0] sm:$0xff]
    %v78 = vld [vmem:[%s0 + $0x8] sm:$0xff]
    %v79 = vld [vmem:[%s0 + $0x18] sm:$0xff]
    %v80 = vld [vmem:[%s0 + $0x20] sm:$0xff]
    %v81 = vld [vmem:[#allocation3] sm:$0xff]
    %v82 = vld [vmem:[#allocation3 + $0x8] sm:$0xff]
    %v83 = vld [vmem:[#allocation3 + $0x10] sm:$0xff]
    %v84 = vld [vmem:[#allocation3 + $0x18] sm:$0xff]
    %v85 = vld [vmem:[#allocation3 + $0x20] sm:$0xff]
    %v86 = vld [vmem:[#allocation3 + $0x28] sm:$0xff]
    %v87 = vld [vmem:[#allocation3 + $0x30] sm:$0xff]
    %v88 = vld [vmem:[#allocation3 + $0x38] sm:$0xff]
    %v89 = vld [vmem:[%s0 + $0x1] sm:$0xff]
    %v90 = vld [vmem:[%s0 + $0x9] sm:$0xff]
    %v91 = vld [vmem:[%s0 + $0x19] sm:$0xff]
    %v92 = vld [vmem:[%s0 + $0x21] sm:$0xff]
    %s93 = scalar_lea.vmem [#allocation3], 64
    %v94 = vld [vmem:[%s93] sm:$0xff]
    %v95 = vld [vmem:[%s93 + $0x8] sm:$0xff]
    %v96 = vld [vmem:[%s93 + $0x10] sm:$0xff]
    %v97 = vld [vmem:[%s93 + $0x18] sm:$0xff]
    %v98 = vld [vmem:[%s93 + $0x20] sm:$0xff]
    %v99 = vld [vmem:[%s93 + $0x28] sm:$0xff]
    %v100 = vld [vmem:[%s93 + $0x30] sm:$0xff]
    %v101 = vld [vmem:[%s93 + $0x38] sm:$0xff]
    %vm102 = vcmask 523264
    %v104 = vsel %vm102, %v89, 0
    %v107 = vsel %vm102, %v90, 0
    %v110 = vsel %vm102, %v91, 0
    %v113 = vsel %vm102, %v92, 0
    %115 = vmatprep.subr.mxu0 0.0
    %116 = vmatpush1.msra.mxu0 %v94
    %117 = vmatprep.subr.mxu0 0.0
    %118 = vmatpush1.msra.mxu0 %v95
    %119 = vmatprep.subr.mxu0 0.0
    %120 = vmatpush1.msra.mxu0 %v96
    %121 = vmatprep.subr.mxu0 0.0
    %122 = vmatpush1.msra.mxu0 %v97
    %123 = vmatprep.subr.mxu0 0.0
    %124 = vmatpush1.msra.mxu0 %v98
    %125 = vmatprep.subr.mxu0 0.0
    %126 = vmatpush1.msra.mxu0 %v99
    %127 = vmatprep.subr.mxu0 0.0
    %128 = vmatpush1.msra.mxu0 %v100
    %129 = vmatprep.subr.mxu0 0.0
    %130 = vmatpush1.msra.mxu0 %v101
    %131 = vmatprep.subr.mxu0 0.0
    %132 = vmatpush1.msra.mxu0 0.0
    %133 = vmatprep.subr.mxu0 0.0
    %134 = vmatpush1.msra.mxu0 0.0
    %135 = vmatprep.subr.mxu0 0.0
    %136 = vmatpush1.msra.mxu0 0.0
    %137 = vmatprep.subr.mxu0 0.0
    %138 = vmatpush1.msra.mxu0 0.0
    %139 = vmatprep.subr.mxu0 0.0
    %140 = vmatpush1.msra.mxu0 0.0
    %141 = vmatprep.subr.mxu0 0.0
    %142 = vmatpush1.msra.mxu0 0.0
    %143 = vmatprep.subr.mxu0 0.0
    %144 = vmatpush1.msra.mxu0 0.0
    %145 = vmatprep.subr.mxu0 0.0
    %146 = vmatpush1.msra.mxu0 0.0
    %147 = vmatprep.subr.mxu0 0.0
    %148 = vmatpush1.msra.mxu0 0.0
    %149 = vmatprep.subr.mxu0 0.0
    %150 = vmatpush1.msra.mxu0 0.0
    %151 = vmatprep.subr.mxu0 0.0
    %152 = vmatpush1.msra.mxu0 0.0
    %153 = vmatprep.subr.mxu0 0.0
    %154 = vmatpush1.msra.mxu0 0.0
    %155 = vmatprep.subr.mxu0 0.0
    %156 = vmatpush1.msra.mxu0 0.0
    %157 = vmatprep.subr.mxu0 0.0
    %158 = vmatpush1.msra.mxu0 0.0
    %159 = vmatprep.subr.mxu0 0.0
    %160 = vmatpush1.msra.mxu0 0.0
    %161 = vmatprep.subr.mxu0 0.0
    %162 = vmatpush1.msra.mxu0 0.0
    %163 = vmatprep.subr.mxu0 0.0
    %164 = vmatpush1.msra.mxu0 0.0
    %165 = vmatprep.subr.mxu0 0.0
    %166 = vmatpush1.msra.mxu0 0.0
    %167 = vmatprep.subr.mxu0 0.0
    %168 = vmatpush1.msra.mxu0 0.0
    %169 = vmatprep.subr.mxu0 0.0
    %170 = vmatpush1.msra.mxu0 0.0
    %171 = vmatprep.subr.mxu0 0.0
    %172 = vmatpush1.msra.mxu0 0.0
    %173 = vmatprep.subr.mxu0 0.0
    %174 = vmatpush1.msra.mxu0 0.0
    %175 = vmatprep.subr.mxu0 0.0
    %176 = vmatpush1.msra.mxu0 0.0
    %177 = vmatprep.subr.mxu0 0.0
    %178 = vmatpush1.msra.mxu0 0.0
    %179 = vmatprep.mubr.f32.mxu0 0.0
    %180 = vmatmul.mubr.f32.gmra.mrb[0].mxu0 %v104
    %v181 = vpop.f32.mrb[0].mxu0
    %v182 = vadd.f32 0.0, %v181
    %v183 = vpop.f32.mrb[0].mxu0
    %184 = vmatprep.mubr.f32.mxu0 0.0
    %185 = vmatmul.mubr.f32.gmra.mrb[0].mxu0 %v107
    %v186 = vpop.f32.mrb[0].mxu0
    %v187 = vadd.f32 0.0, %v186
    %v188 = vpop.f32.mrb[0].mxu0
    %189 = vmatprep.mubr.f32.mxu0 0.0
    %190 = vmatmul.mubr.f32.gmra.mrb[0].mxu0 %v110
    %v191 = vpop.f32.mrb[0].mxu0
    %v192 = vadd.f32 0.0, %v191
    %v193 = vpop.f32.mrb[0].mxu0
    %194 = vmatprep.mubr.f32.mxu0 0.0
    %195 = vmatmul.mubr.f32.gmra.mrb[0].mxu0 %v113
    %v196 = vpop.f32.mrb[0].mxu0
    %v197 = vadd.f32 0.0, %v196
    %v198 = vpop.f32.mrb[0].mxu0
    %199 = vdwg.mxu0
    %v201 = vsel %vm102, %v77, 0
    %v204 = vsel %vm102, %v78, 0
    %v207 = vsel %vm102, %v79, 0
    %v210 = vsel %vm102, %v80, 0
    %212 = vmatprep.subr.mxu0 0.0
    %213 = vmatpush1.msra.mxu0 %v81
    %214 = vmatprep.subr.mxu0 0.0
    %215 = vmatpush1.msra.mxu0 %v82
    %216 = vmatprep.subr.mxu0 0.0
    %217 = vmatpush1.msra.mxu0 %v83
    %218 = vmatprep.subr.mxu0 0.0
    %219 = vmatpush1.msra.mxu0 %v84
    %220 = vmatprep.subr.mxu0 0.0
    %221 = vmatpush1.msra.mxu0 %v85
    %222 = vmatprep.subr.mxu0 0.0
    %223 = vmatpush1.msra.mxu0 %v86
    %224 = vmatprep.subr.mxu0 0.0
    %225 = vmatpush1.msra.mxu0 %v87
    %226 = vmatprep.subr.mxu0 0.0
    %227 = vmatpush1.msra.mxu0 %v88
    %228 = vmatprep.subr.mxu0 0.0
    %229 = vmatpush1.msra.mxu0 0.0
    %230 = vmatprep.subr.mxu0 0.0
    %231 = vmatpush1.msra.mxu0 0.0
    %232 = vmatprep.subr.mxu0 0.0
    %233 = vmatpush1.msra.mxu0 0.0
    %234 = vmatprep.subr.mxu0 0.0
    %235 = vmatpush1.msra.mxu0 0.0
    %236 = vmatprep.subr.mxu0 0.0
    %237 = vmatpush1.msra.mxu0 0.0
    %238 = vmatprep.subr.mxu0 0.0
    %239 = vmatpush1.msra.mxu0 0.0
    %240 = vmatprep.subr.mxu0 0.0
    %241 = vmatpush1.msra.mxu0 0.0
    %242 = vmatprep.subr.mxu0 0.0
    %243 = vmatpush1.msra.mxu0 0.0
    %244 = vmatprep.subr.mxu0 0.0
    %245 = vmatpush1.msra.mxu0 0.0
    %246 = vmatprep.subr.mxu0 0.0
    %247 = vmatpush1.msra.mxu0 0.0
    %248 = vmatprep.subr.mxu0 0.0
    %249 = vmatpush1.msra.mxu0 0.0
    %250 = vmatprep.subr.mxu0 0.0
    %251 = vmatpush1.msra.mxu0 0.0
    %252 = vmatprep.subr.mxu0 0.0
    %253 = vmatpush1.msra.mxu0 0.0
    %254 = vmatprep.subr.mxu0 0.0
    %255 = vmatpush1.msra.mxu0 0.0
    %256 = vmatprep.subr.mxu0 0.0
    %257 = vmatpush1.msra.mxu0 0.0
    %258 = vmatprep.subr.mxu0 0.0
    %259 = vmatpush1.msra.mxu0 0.0
    %260 = vmatprep.subr.mxu0 0.0
    %261 = vmatpush1.msra.mxu0 0.0
    %262 = vmatprep.subr.mxu0 0.0
    %263 = vmatpush1.msra.mxu0 0.0
    %264 = vmatprep.subr.mxu0 0.0
    %265 = vmatpush1.msra.mxu0 0.0
    %266 = vmatprep.subr.mxu0 0.0
    %267 = vmatpush1.msra.mxu0 0.0
    %268 = vmatprep.subr.mxu0 0.0
    %269 = vmatpush1.msra.mxu0 0.0
    %270 = vmatprep.subr.mxu0 0.0
    %271 = vmatpush1.msra.mxu0 0.0
    %272 = vmatprep.subr.mxu0 0.0
    %273 = vmatpush1.msra.mxu0 0.0
    %274 = vmatprep.subr.mxu0 0.0
    %275 = vmatpush1.msra.mxu0 0.0
    %276 = vmatprep.mubr.f32.mxu0 0.0
    %277 = vmatmul.mubr.f32.gmra.mrb[0].mxu0 %v201
    %v278 = vpop.f32.mrb[0].mxu0
    %v279 = vadd.f32 %v182, %v278
    %v280 = vpop.f32.mrb[0].mxu0
    %281 = vmatprep.mubr.f32.mxu0 0.0
    %282 = vmatmul.mubr.f32.gmra.mrb[0].mxu0 %v204
    %v283 = vpop.f32.mrb[0].mxu0
    %v284 = vadd.f32 %v187, %v283
    %v285 = vpop.f32.mrb[0].mxu0
    %286 = vmatprep.mubr.f32.mxu0 0.0
    %287 = vmatmul.mubr.f32.gmra.mrb[0].mxu0 %v207
    %v288 = vpop.f32.mrb[0].mxu0
    %v289 = vadd.f32 %v192, %v288
    %v290 = vpop.f32.mrb[0].mxu0
    %291 = vmatprep.mubr.f32.mxu0 0.0
    %292 = vmatmul.mubr.f32.gmra.mrb[0].mxu0 %v210
    %v293 = vpop.f32.mrb[0].mxu0
    %v294 = vadd.f32 %v197, %v293
    %v295 = vpop.f32.mrb[0].mxu0
    %296 = vdwg.mxu0
    %v297 = vld [vmem:[%s0 + $0x2] sm:$0xff]
    %v298 = vld [vmem:[%s0 + $0xa] sm:$0xff]
    %v299 = vld [vmem:[%s0 + $0x1a] sm:$0xff]
    %v300 = vld [vmem:[%s0 + $0x22] sm:$0xff]
    %s301 = scalar_lea.vmem [#allocation3], 128
    %v302 = vld [vmem:[%s301] sm:$0xff]
    %v303 = vld [vmem:[%s301 + $0x8] sm:$0xff]
    %v304 = vld [vmem:[%s301 + $0x10] sm:$0xff]
    %v305 = vld [vmem:[%s301 + $0x18] sm:$0xff]
    %v306 = vld [vmem:[%s301 + $0x20] sm:$0xff]
    %v307 = vld [vmem:[%s301 + $0x28] sm:$0xff]
    %v308 = vld [vmem:[%s301 + $0x30] sm:$0xff]
    %v309 = vld [vmem:[%s301 + $0x38] sm:$0xff]
    %v311 = vsel %vm102, %v297, 0
    %v314 = vsel %vm102, %v298, 0
    %v317 = vsel %vm102, %v299, 0
    %v320 = vsel %vm102, %v300, 0
    %322 = vmatprep.subr.mxu0 0.0
    %323 = vmatpush1.msra.mxu0 %v302
    %324 = vmatprep.subr.mxu0 0.0
    %325 = vmatpush1.msra.mxu0 %v303
    %326 = vmatprep.subr.mxu0 0.0
    %327 = vmatpush1.msra.mxu0 %v304
    %328 = vmatprep.subr.mxu0 0.0
    %329 = vmatpush1.msra.mxu0 %v305
    %330 = vmatprep.subr.mxu0 0.0
    %331 = vmatpush1.msra.mxu0 %v306
    %332 = vmatprep.subr.mxu0 0.0
    %333 = vmatpush1.msra.mxu0 %v307
    %334 = vmatprep.subr.mxu0 0.0
    %335 = vmatpush1.msra.mxu0 %v308
    %336 = vmatprep.subr.mxu0 0.0
    %337 = vmatpush1.msra.mxu0 %v309
    %338 = vmatprep.subr.mxu0 0.0
    %339 = vmatpush1.msra.mxu0 0.0
    %340 = vmatprep.subr.mxu0 0.0
    %341 = vmatpush1.msra.mxu0 0.0
    %342 = vmatprep.subr.mxu0 0.0
    %343 = vmatpush1.msra.mxu0 0.0
    %344 = vmatprep.subr.mxu0 0.0
    %345 = vmatpush1.msra.mxu0 0.0
    %346 = vmatprep.subr.mxu0 0.0
    %347 = vmatpush1.msra.mxu0 0.0
    %348 = vmatprep.subr.mxu0 0.0
    %349 = vmatpush1.msra.mxu0 0.0
    %350 = vmatprep.subr.mxu0 0.0
    %351 = vmatpush1.msra.mxu0 0.0
    %352 = vmatprep.subr.mxu0 0.0
    %353 = vmatpush1.msra.mxu0 0.0
    %354 = vmatprep.subr.mxu0 0.0
    %355 = vmatpush1.msra.mxu0 0.0
    %356 = vmatprep.subr.mxu0 0.0
    %357 = vmatpush1.msra.mxu0 0.0
    %358 = vmatprep.subr.mxu0 0.0
    %359 = vmatpush1.msra.mxu0 0.0
    %360 = vmatprep.subr.mxu0 0.0
    %361 = vmatpush1.msra.mxu0 0.0
    %362 = vmatprep.subr.mxu0 0.0
    %363 = vmatpush1.msra.mxu0 0.0
    %364 = vmatprep.subr.mxu0 0.0
    %365 = vmatpush1.msra.mxu0 0.0
    %366 = vmatprep.subr.mxu0 0.0
    %367 = vmatpush1.msra.mxu0 0.0
    %368 = vmatprep.subr.mxu0 0.0
    %369 = vmatpush1.msra.mxu0 0.0
    %370 = vmatprep.subr.mxu0 0.0
    %371 = vmatpush1.msra.mxu0 0.0
    %372 = vmatprep.subr.mxu0 0.0
    %373 = vmatpush1.msra.mxu0 0.0
    %374 = vmatprep.subr.mxu0 0.0
    %375 = vmatpush1.msra.mxu0 0.0
    %376 = vmatprep.subr.mxu0 0.0
    %377 = vmatpush1.msra.mxu0 0.0
    %378 = vmatprep.subr.mxu0 0.0
    %379 = vmatpush1.msra.mxu0 0.0
    %380 = vmatprep.subr.mxu0 0.0
    %381 = vmatpush1.msra.mxu0 0.0
    %382 = vmatprep.subr.mxu0 0.0
    %383 = vmatpush1.msra.mxu0 0.0
    %384 = vmatprep.subr.mxu0 0.0
    %385 = vmatpush1.msra.mxu0 0.0
    %386 = vmatprep.mubr.f32.mxu0 0.0
    %387 = vmatmul.mubr.f32.gmra.mrb[0].mxu0 %v311
    %v388 = vpop.f32.mrb[0].mxu0
    %v389 = vadd.f32 0.0, %v388
    %v390 = vpop.f32.mrb[0].mxu0
    %391 = vmatprep.mubr.f32.mxu0 0.0
    %392 = vmatmul.mubr.f32.gmra.mrb[0].mxu0 %v314
    %v393 = vpop.f32.mrb[0].mxu0
    %v394 = vadd.f32 0.0, %v393
    %v395 = vpop.f32.mrb[0].mxu0
    %396 = vmatprep.mubr.f32.mxu0 0.0
    %397 = vmatmul.mubr.f32.gmra.mrb[0].mxu0 %v317
    %v398 = vpop.f32.mrb[0].mxu0
    %v399 = vadd.f32 0.0, %v398
    %v400 = vpop.f32.mrb[0].mxu0
    %401 = vmatprep.mubr.f32.mxu0 0.0
    %402 = vmatmul.mubr.f32.gmra.mrb[0].mxu0 %v320
    %v403 = vpop.f32.mrb[0].mxu0
    %v404 = vadd.f32 0.0, %v403
    %v405 = vpop.f32.mrb[0].mxu0
    %406 = vdwg.mxu0
    %v407 = vadd.f32 %v279, %v389
    %v408 = vadd.f32 %v284, %v394
    %v409 = vadd.f32 %v289, %v399
    %v410 = vadd.f32 %v294, %v404
    %v411 = vld [vmem:[%s2] sm:$0x1]
    %v413 = vlaneseq
    %v414 = vshrl.u32 %v413, 7
    %v415 = vsub.s32 0, %v414
    %v416 = vrot.slane %v411, %v415
    %v418 = vadd.f32 %v407, %v416
    %v419 = vadd.f32 %v408, %v416
    %v420 = vadd.f32 %v409, %v416
    %v421 = vadd.f32 %v410, %v416
    %v422 = vadd.f32 %v418, %v419
    %v423 = vadd.f32 %v422, %v420
    %v424 = vadd.f32 %v423, %v421
    %v425 = vrot.slane %v424, 4
    %v426 = vadd.f32 %v424, %v425
    %v427 = vrot.slane %v426, 2
    %v428 = vadd.f32 %v426, %v427
    %v429 = vrot.slane %v428, 1
    %v430 = vadd.f32 %v428, %v429
    %v431 = vld [vmem:[#allocation8] sm:$0xff]
    %v432 = vld [vmem:[#allocation8 + $0x8] sm:$0xff]
    %v433 = vld [vmem:[#allocation8 + $0x10] sm:$0xff]
    %v434 = vld [vmem:[#allocation8 + $0x18] sm:$0xff]
    %v435 = vld [vmem:[#allocation8 + $0x20] sm:$0xff]
    %v436 = vld [vmem:[#allocation8 + $0x28] sm:$0xff]
    %v437 = vld [vmem:[#allocation8 + $0x30] sm:$0xff]
    %v438 = vld [vmem:[#allocation8 + $0x38] sm:$0xff]
    %v439 = vld [vmem:[#allocation8 + $0x40] sm:$0xff]
    %v440 = vld [vmem:[#allocation8 + $0x48] sm:$0xff]
    %v441 = vld [vmem:[#allocation8 + $0x50] sm:$0xff]
    %v442 = vld [vmem:[#allocation8 + $0x58] sm:$0xff]
    %v443 = vld [vmem:[#allocation8 + $0x60] sm:$0xff]
    %v444 = vld [vmem:[#allocation8 + $0x68] sm:$0xff]
    %v445 = vld [vmem:[#allocation8 + $0x70] sm:$0xff]
    %v446 = vld [vmem:[#allocation8 + $0x78] sm:$0xff]
    %447 = vmatprep.subr.mxu0 0.0
    %448 = vmatpush1.msra.mxu0 %v431
    %449 = vmatprep.subr.mxu0 0.0
    %450 = vmatpush1.msra.mxu0 %v432
    %451 = vmatprep.subr.mxu0 0.0
    %452 = vmatpush1.msra.mxu0 %v433
    %453 = vmatprep.subr.mxu0 0.0
    %454 = vmatpush1.msra.mxu0 %v434
    %455 = vmatprep.subr.mxu0 0.0
    %456 = vmatpush1.msra.mxu0 %v435
    %457 = vmatprep.subr.mxu0 0.0
    %458 = vmatpush1.msra.mxu0 %v436
    %459 = vmatprep.subr.mxu0 0.0
    %460 = vmatpush1.msra.mxu0 %v437
    %461 = vmatprep.subr.mxu0 0.0
    %462 = vmatpush1.msra.mxu0 %v438
    %463 = vmatprep.subr.mxu0 0.0
    %464 = vmatpush1.msra.mxu0 %v439
    %465 = vmatprep.subr.mxu0 0.0
    %466 = vmatpush1.msra.mxu0 %v440
    %467 = vmatprep.subr.mxu0 0.0
    %468 = vmatpush1.msra.mxu0 %v441
    %469 = vmatprep.subr.mxu0 0.0
    %470 = vmatpush1.msra.mxu0 %v442
    %471 = vmatprep.subr.mxu0 0.0
    %472 = vmatpush1.msra.mxu0 %v443
    %473 = vmatprep.subr.mxu0 0.0
    %474 = vmatpush1.msra.mxu0 %v444
    %475 = vmatprep.subr.mxu0 0.0
    %476 = vmatpush1.msra.mxu0 %v445
    %477 = vmatprep.subr.mxu0 0.0
    %478 = vmatpush1.msra.mxu0 %v446
    %479 = vmatprep.subr.mxu0 0.0
    %480 = vmatpush1.msra.mxu0 0.0
    %481 = vmatprep.subr.mxu0 0.0
    %482 = vmatpush1.msra.mxu0 0.0
    %483 = vmatprep.subr.mxu0 0.0
    %484 = vmatpush1.msra.mxu0 0.0
    %485 = vmatprep.subr.mxu0 0.0
    %486 = vmatpush1.msra.mxu0 0.0
    %487 = vmatprep.subr.mxu0 0.0
    %488 = vmatpush1.msra.mxu0 0.0
    %489 = vmatprep.subr.mxu0 0.0
    %490 = vmatpush1.msra.mxu0 0.0
    %491 = vmatprep.subr.mxu0 0.0
    %492 = vmatpush1.msra.mxu0 0.0
    %493 = vmatprep.subr.mxu0 0.0
    %494 = vmatpush1.msra.mxu0 0.0
    %495 = vmatprep.subr.mxu0 0.0
    %496 = vmatpush1.msra.mxu0 0.0
    %497 = vmatprep.subr.mxu0 0.0
    %498 = vmatpush1.msra.mxu0 0.0
    %499 = vmatprep.subr.mxu0 0.0
    %500 = vmatpush1.msra.mxu0 0.0
    %501 = vmatprep.subr.mxu0 0.0
    %502 = vmatpush1.msra.mxu0 0.0
    %503 = vmatprep.subr.mxu0 0.0
    %504 = vmatpush1.msra.mxu0 0.0
    %505 = vmatprep.subr.mxu0 0.0
    %506 = vmatpush1.msra.mxu0 0.0
    %507 = vmatprep.subr.mxu0 0.0
    %508 = vmatpush1.msra.mxu0 0.0
    %509 = vmatprep.subr.mxu0 0.0
    %510 = vmatpush1.msra.mxu0 0.0
    %511 = vmatprep.mubr.f32.mxu0 0.0
    %512 = vmatmul.mubr.f32.gmra.mrb[0].mxu0 %v430
    %v513 = vpop.f32.mrb[0].mxu0
    %v514 = vadd.f32 0.0, %v513
    %v515 = vpop.f32.mrb[0].mxu0
    %516 = vdwg.mxu0
    %v517 = vmul.f32 %v514, 0.001953125
    %v518 = vlaneseq
    %v519 = vshrl.u32 %v518, 7
    %v520 = vsub.s32 0, %v519
    %v521 = vrot.slane %v517, %v520
    %v522 = vsub.f32 %v418, %v521
    %v523 = vsub.f32 %v419, %v521
    %v524 = vsub.f32 %v420, %v521
    %v525 = vsub.f32 %v421, %v521
    %v526 = vmul.f32 %v522, %v522
    %v527 = vmul.f32 %v523, %v523
    %v528 = vmul.f32 %v524, %v524
    %v529 = vmul.f32 %v525, %v525
    %v530 = vadd.f32 %v526, %v527
    %v531 = vadd.f32 %v530, %v528
    %v532 = vadd.f32 %v531, %v529
    %v533 = vrot.slane %v532, 4
    %v534 = vadd.f32 %v532, %v533
    %v535 = vrot.slane %v534, 2
    %v536 = vadd.f32 %v534, %v535
    %v537 = vrot.slane %v536, 1
    %v538 = vadd.f32 %v536, %v537
    %539 = vmatprep.subr.mxu0 0.0
    %540 = vmatpush1.msra.mxu0 %v431
    %541 = vmatprep.subr.mxu0 0.0
    %542 = vmatpush1.msra.mxu0 %v432
    %543 = vmatprep.subr.mxu0 0.0
    %544 = vmatpush1.msra.mxu0 %v433
    %545 = vmatprep.subr.mxu0 0.0
    %546 = vmatpush1.msra.mxu0 %v434
    %547 = vmatprep.subr.mxu0 0.0
    %548 = vmatpush1.msra.mxu0 %v435
    %549 = vmatprep.subr.mxu0 0.0
    %550 = vmatpush1.msra.mxu0 %v436
    %551 = vmatprep.subr.mxu0 0.0
    %552 = vmatpush1.msra.mxu0 %v437
    %553 = vmatprep.subr.mxu0 0.0
    %554 = vmatpush1.msra.mxu0 %v438
    %555 = vmatprep.subr.mxu0 0.0
    %556 = vmatpush1.msra.mxu0 %v439
    %557 = vmatprep.subr.mxu0 0.0
    %558 = vmatpush1.msra.mxu0 %v440
    %559 = vmatprep.subr.mxu0 0.0
    %560 = vmatpush1.msra.mxu0 %v441
    %561 = vmatprep.subr.mxu0 0.0
    %562 = vmatpush1.msra.mxu0 %v442
    %563 = vmatprep.subr.mxu0 0.0
    %564 = vmatpush1.msra.mxu0 %v443
    %565 = vmatprep.subr.mxu0 0.0
    %566 = vmatpush1.msra.mxu0 %v444
    %567 = vmatprep.subr.mxu0 0.0
    %568 = vmatpush1.msra.mxu0 %v445
    %569 = vmatprep.subr.mxu0 0.0
    %570 = vmatpush1.msra.mxu0 %v446
    %571 = vmatprep.subr.mxu0 0.0
    %572 = vmatpush1.msra.mxu0 0.0
    %573 = vmatprep.subr.mxu0 0.0
    %574 = vmatpush1.msra.mxu0 0.0
    %575 = vmatprep.subr.mxu0 0.0
    %576 = vmatpush1.msra.mxu0 0.0
    %577 = vmatprep.subr.mxu0 0.0
    %578 = vmatpush1.msra.mxu0 0.0
    %579 = vmatprep.subr.mxu0 0.0
    %580 = vmatpush1.msra.mxu0 0.0
    %581 = vmatprep.subr.mxu0 0.0
    %582 = vmatpush1.msra.mxu0 0.0
    %583 = vmatprep.subr.mxu0 0.0
    %584 = vmatpush1.msra.mxu0 0.0
    %585 = vmatprep.subr.mxu0 0.0
    %586 = vmatpush1.msra.mxu0 0.0
    %587 = vmatprep.subr.mxu0 0.0
    %588 = vmatpush1.msra.mxu0 0.0
    %589 = vmatprep.subr.mxu0 0.0
    %590 = vmatpush1.msra.mxu0 0.0
    %591 = vmatprep.subr.mxu0 0.0
    %592 = vmatpush1.msra.mxu0 0.0
    %593 = vmatprep.subr.mxu0 0.0
    %594 = vmatpush1.msra.mxu0 0.0
    %595 = vmatprep.subr.mxu0 0.0
    %596 = vmatpush1.msra.mxu0 0.0
    %597 = vmatprep.subr.mxu0 0.0
    %598 = vmatpush1.msra.mxu0 0.0
    %599 = vmatprep.subr.mxu0 0.0
    %600 = vmatpush1.msra.mxu0 0.0
    %601 = vmatprep.subr.mxu0 0.0
    %602 = vmatpush1.msra.mxu0 0.0
    %603 = vmatprep.mubr.f32.mxu0 0.0
    %604 = vmatmul.mubr.f32.gmra.mrb[0].mxu0 %v538
    %v605 = vpop.f32.mrb[0].mxu0
    %v606 = vadd.f32 0.0, %v605
    %v607 = vpop.f32.mrb[0].mxu0
    %608 = vdwg.mxu0
    %v609 = vmul.f32 %v606, 0.001953125
    %v610 = vadd.f32 %v609, 1e-05
    %v611 = vrsqrt.pop %v610
    %v612 = vlaneseq
    %v613 = vshrl.u32 %v612, 7
    %v614 = vsub.s32 0, %v613
    %v615 = vrot.slane %v611, %v614
    %v616 = vmul.f32 %v522, %v615
    %v617 = vmul.f32 %v523, %v615
    %v618 = vmul.f32 %v524, %v615
    %v619 = vmul.f32 %v525, %v615
    %v620 = vld [vmem:[%s3] sm:$0x1]
    %v622 = vlaneseq
    %v623 = vshrl.u32 %v622, 7
    %v624 = vsub.s32 0, %v623
    %v625 = vrot.slane %v620, %v624
    %v627 = vmul.f32 %v616, %v625
    %v628 = vmul.f32 %v617, %v625
    %v629 = vmul.f32 %v618, %v625
    %v630 = vmul.f32 %v619, %v625
    %v631 = vld [vmem:[%s4] sm:$0x1]
    %v633 = vlaneseq
    %v634 = vshrl.u32 %v633, 7
    %v635 = vsub.s32 0, %v634
    %v636 = vrot.slane %v631, %v635
    %v638 = vadd.f32 %v627, %v636
    %v639 = vadd.f32 %v628, %v636
    %v640 = vadd.f32 %v629, %v636
    %v641 = vadd.f32 %v630, %v636
    %vm642 = vcmp.gt.f32.partialorder %v638, 0.0
    %vm643 = vcmp.gt.f32.partialorder %v639, 0.0
    %vm644 = vcmp.gt.f32.partialorder %v640, 0.0
    %vm645 = vcmp.gt.f32.partialorder %v641, 0.0
    %v646 = vmul.f32 %v638, 0.01
    %v647 = vmul.f32 %v639, 0.01
    %v648 = vmul.f32 %v640, 0.01
    %v649 = vmul.f32 %v641, 0.01
    %v650 = vsel %vm642, %v638, %v646
    %v651 = vsel %vm643, %v639, %v647
    %v652 = vsel %vm644, %v640, %v648
    %v653 = vsel %vm645, %v641, %v649
    %654 = vst [vmem:[#allocation2] sm:$0x1] 0.0
    %655 = vst [vmem:[#allocation2 + $0x18] sm:$0x1] 0.0
    %656 = vst [vmem:[#allocation2 + $0x11] sm:$0x1] 0.0
    %657 = vst [vmem:[#allocation2 + $0x29] sm:$0x1] 0.0
    %658 = vst [vmem:[#allocation2 + $0x1] sm:$0xff] %v650
    %659 = vst [vmem:[#allocation2 + $0x9] sm:$0xff] %v651
    %660 = vst [vmem:[#allocation2 + $0x19] sm:$0xff] %v652
    %661 = vst [vmem:[#allocation2 + $0x21] sm:$0xff] %v653
    %v662 = vld [vmem:[#allocation2] sm:$0xff]
    %v663 = vld [vmem:[#allocation2 + $0x8] sm:$0xff]
    %v664 = vld [vmem:[#allocation2 + $0x18] sm:$0xff]
    %v665 = vld [vmem:[#allocation2 + $0x20] sm:$0xff]
    %v666 = vld [vmem:[#allocation6] sm:$0xff]
    %v667 = vld [vmem:[#allocation6 + $0x8] sm:$0xff]
    %v668 = vld [vmem:[#allocation6 + $0x10] sm:$0xff]
    %v669 = vld [vmem:[#allocation6 + $0x18] sm:$0xff]
    %v670 = vld [vmem:[#allocation6 + $0x20] sm:$0xff]
    %v671 = vld [vmem:[#allocation6 + $0x28] sm:$0xff]
    %v672 = vld [vmem:[#allocation6 + $0x30] sm:$0xff]
    %v673 = vld [vmem:[#allocation6 + $0x38] sm:$0xff]
    %v674 = vld [vmem:[#allocation6 + $0x40] sm:$0xff]
    %v675 = vld [vmem:[#allocation6 + $0x48] sm:$0xff]
    %v676 = vld [vmem:[#allocation6 + $0x50] sm:$0xff]
    %v677 = vld [vmem:[#allocation6 + $0x58] sm:$0xff]
    %v678 = vld [vmem:[#allocation6 + $0x60] sm:$0xff]
    %v679 = vld [vmem:[#allocation6 + $0x68] sm:$0xff]
    %v680 = vld [vmem:[#allocation6 + $0x70] sm:$0xff]
    %v681 = vld [vmem:[#allocation6 + $0x78] sm:$0xff]
    %v682 = vld [vmem:[#allocation2 + $0x1] sm:$0xff]
    %v683 = vld [vmem:[#allocation2 + $0x9] sm:$0xff]
    %v684 = vld [vmem:[#allocation2 + $0x19] sm:$0xff]
    %v685 = vld [vmem:[#allocation2 + $0x21] sm:$0xff]
    %s686 = scalar_lea.vmem [#allocation6], 128
    %v687 = vld [vmem:[%s686] sm:$0xff]
    %v688 = vld [vmem:[%s686 + $0x8] sm:$0xff]
    %v689 = vld [vmem:[%s686 + $0x10] sm:$0xff]
    %v690 = vld [vmem:[%s686 + $0x18] sm:$0xff]
    %v691 = vld [vmem:[%s686 + $0x20] sm:$0xff]
    %v692 = vld [vmem:[%s686 + $0x28] sm:$0xff]
    %v693 = vld [vmem:[%s686 + $0x30] sm:$0xff]
    %v694 = vld [vmem:[%s686 + $0x38] sm:$0xff]
    %v695 = vld [vmem:[%s686 + $0x40] sm:$0xff]
    %v696 = vld [vmem:[%s686 + $0x48] sm:$0xff]
    %v697 = vld [vmem:[%s686 + $0x50] sm:$0xff]
    %v698 = vld [vmem:[%s686 + $0x58] sm:$0xff]
    %v699 = vld [vmem:[%s686 + $0x60] sm:$0xff]
    %v700 = vld [vmem:[%s686 + $0x68] sm:$0xff]
    %v701 = vld [vmem:[%s686 + $0x70] sm:$0xff]
    %v702 = vld [vmem:[%s686 + $0x78] sm:$0xff]
    %703 = vmatprep.subr.mxu0 0.0
    %704 = vmatpush1.msra.mxu0 %v687
    %705 = vmatprep.subr.mxu0 0.0
    %706 = vmatpush1.msra.mxu0 %v688
    %707 = vmatprep.subr.mxu0 0.0
    %708 = vmatpush1.msra.mxu0 %v689
    %709 = vmatprep.subr.mxu0 0.0
    %710 = vmatpush1.msra.mxu0 %v690
    %711 = vmatprep.subr.mxu0 0.0
    %712 = vmatpush1.msra.mxu0 %v691
    %713 = vmatprep.subr.mxu0 0.0
    %714 = vmatpush1.msra.mxu0 %v692
    %715 = vmatprep.subr.mxu0 0.0
    %716 = vmatpush1.msra.mxu0 %v693
    %717 = vmatprep.subr.mxu0 0.0
    %718 = vmatpush1.msra.mxu0 %v694
    %719 = vmatprep.subr.mxu0 0.0
    %720 = vmatpush1.msra.mxu0 %v695
    %721 = vmatprep.subr.mxu0 0.0
    %722 = vmatpush1.msra.mxu0 %v696
    %723 = vmatprep.subr.mxu0 0.0
    %724 = vmatpush1.msra.mxu0 %v697
    %725 = vmatprep.subr.mxu0 0.0
    %726 = vmatpush1.msra.mxu0 %v698
    %727 = vmatprep.subr.mxu0 0.0
    %728 = vmatpush1.msra.mxu0 %v699
    %729 = vmatprep.subr.mxu0 0.0
    %730 = vmatpush1.msra.mxu0 %v700
    %731 = vmatprep.subr.mxu0 0.0
    %732 = vmatpush1.msra.mxu0 %v701
    %733 = vmatprep.subr.mxu0 0.0
    %734 = vmatpush1.msra.mxu0 %v702
    %735 = vmatprep.subr.mxu0 0.0
    %736 = vmatpush1.msra.mxu0 0.0
    %737 = vmatprep.subr.mxu0 0.0
    %738 = vmatpush1.msra.mxu0 0.0
    %739 = vmatprep.subr.mxu0 0.0
    %740 = vmatpush1.msra.mxu0 0.0
    %741 = vmatprep.subr.mxu0 0.0
    %742 = vmatpush1.msra.mxu0 0.0
    %743 = vmatprep.subr.mxu0 0.0
    %744 = vmatpush1.msra.mxu0 0.0
    %745 = vmatprep.subr.mxu0 0.0
    %746 = vmatpush1.msra.mxu0 0.0
    %747 = vmatprep.subr.mxu0 0.0
    %748 = vmatpush1.msra.mxu0 0.0
    %749 = vmatprep.subr.mxu0 0.0
    %750 = vmatpush1.msra.mxu0 0.0
    %751 = vmatprep.subr.mxu0 0.0
    %752 = vmatpush1.msra.mxu0 0.0
    %753 = vmatprep.subr.mxu0 0.0
    %754 = vmatpush1.msra.mxu0 0.0
    %755 = vmatprep.subr.mxu0 0.0
    %756 = vmatpush1.msra.mxu0 0.0
    %757 = vmatprep.subr.mxu0 0.0
    %758 = vmatpush1.msra.mxu0 0.0
    %759 = vmatprep.subr.mxu0 0.0
    %760 = vmatpush1.msra.mxu0 0.0
    %761 = vmatprep.subr.mxu0 0.0
    %762 = vmatpush1.msra.mxu0 0.0
    %763 = vmatprep.subr.mxu0 0.0
    %764 = vmatpush1.msra.mxu0 0.0
    %765 = vmatprep.subr.mxu0 0.0
    %766 = vmatpush1.msra.mxu0 0.0
    %767 = vmatprep.mubr.f32.mxu0 0.0
    %768 = vmatmul.mubr.f32.gmra.mrb[0].mxu0 %v682
    %v769 = vpop.f32.mrb[0].mxu0
    %v770 = vadd.f32 0.0, %v769
    %v771 = vpop.f32.mrb[0].mxu0
    %772 = vmatprep.mubr.f32.mxu0 0.0
    %773 = vmatmul.mubr.f32.gmra.mrb[0].mxu0 %v683
    %v774 = vpop.f32.mrb[0].mxu0
    %v775 = vadd.f32 0.0, %v774
    %v776 = vpop.f32.mrb[0].mxu0
    %777 = vmatprep.mubr.f32.mxu0 0.0
    %778 = vmatmul.mubr.f32.gmra.mrb[0].mxu0 %v684
    %v779 = vpop.f32.mrb[0].mxu0
    %v780 = vadd.f32 0.0, %v779
    %v781 = vpop.f32.mrb[0].mxu0
    %782 = vmatprep.mubr.f32.mxu0 0.0
    %783 = vmatmul.mubr.f32.gmra.mrb[0].mxu0 %v685
    %v784 = vpop.f32.mrb[0].mxu0
    %v785 = vadd.f32 0.0, %v784
    %v786 = vpop.f32.mrb[0].mxu0
    %787 = vdwg.mxu0
    %788 = vmatprep.subr.mxu0 0.0
    %789 = vmatpush1.msra.mxu0 %v666
    %790 = vmatprep.subr.mxu0 0.0
    %791 = vmatpush1.msra.mxu0 %v667
    %792 = vmatprep.subr.mxu0 0.0
    %793 = vmatpush1.msra.mxu0 %v668
    %794 = vmatprep.subr.mxu0 0.0
    %795 = vmatpush1.msra.mxu0 %v669
    %796 = vmatprep.subr.mxu0 0.0
    %797 = vmatpush1.msra.mxu0 %v670
    %798 = vmatprep.subr.mxu0 0.0
    %799 = vmatpush1.msra.mxu0 %v671
    %800 = vmatprep.subr.mxu0 0.0
    %801 = vmatpush1.msra.mxu0 %v672
    %802 = vmatprep.subr.mxu0 0.0
    %803 = vmatpush1.msra.mxu0 %v673
    %804 = vmatprep.subr.mxu0 0.0
    %805 = vmatpush1.msra.mxu0 %v674
    %806 = vmatprep.subr.mxu0 0.0
    %807 = vmatpush1.msra.mxu0 %v675
    %808 = vmatprep.subr.mxu0 0.0
    %809 = vmatpush1.msra.mxu0 %v676
    %810 = vmatprep.subr.mxu0 0.0
    %811 = vmatpush1.msra.mxu0 %v677
    %812 = vmatprep.subr.mxu0 0.0
    %813 = vmatpush1.msra.mxu0 %v678
    %814 = vmatprep.subr.mxu0 0.0
    %815 = vmatpush1.msra.mxu0 %v679
    %816 = vmatprep.subr.mxu0 0.0
    %817 = vmatpush1.msra.mxu0 %v680
    %818 = vmatprep.subr.mxu0 0.0
    %819 = vmatpush1.msra.mxu0 %v681
    %820 = vmatprep.subr.mxu0 0.0
    %821 = vmatpush1.msra.mxu0 0.0
    %822 = vmatprep.subr.mxu0 0.0
    %823 = vmatpush1.msra.mxu0 0.0
    %824 = vmatprep.subr.mxu0 0.0
    %825 = vmatpush1.msra.mxu0 0.0
    %826 = vmatprep.subr.mxu0 0.0
    %827 = vmatpush1.msra.mxu0 0.0
    %828 = vmatprep.subr.mxu0 0.0
    %829 = vmatpush1.msra.mxu0 0.0
    %830 = vmatprep.subr.mxu0 0.0
    %831 = vmatpush1.msra.mxu0 0.0
    %832 = vmatprep.subr.mxu0 0.0
    %833 = vmatpush1.msra.mxu0 0.0
    %834 = vmatprep.subr.mxu0 0.0
    %835 = vmatpush1.msra.mxu0 0.0
    %836 = vmatprep.subr.mxu0 0.0
    %837 = vmatpush1.msra.mxu0 0.0
    %838 = vmatprep.subr.mxu0 0.0
    %839 = vmatpush1.msra.mxu0 0.0
    %840 = vmatprep.subr.mxu0 0.0
    %841 = vmatpush1.msra.mxu0 0.0
    %842 = vmatprep.subr.mxu0 0.0
    %843 = vmatpush1.msra.mxu0 0.0
    %844 = vmatprep.subr.mxu0 0.0
    %845 = vmatpush1.msra.mxu0 0.0
    %846 = vmatprep.subr.mxu0 0.0
    %847 = vmatpush1.msra.mxu0 0.0
    %848 = vmatprep.subr.mxu0 0.0
    %849 = vmatpush1.msra.mxu0 0.0
    %850 = vmatprep.subr.mxu0 0.0
    %851 = vmatpush1.msra.mxu0 0.0
    %852 = vmatprep.mubr.f32.mxu0 0.0
    %853 = vmatmul.mubr.f32.gmra.mrb[0].mxu0 %v662
    %v854 = vpop.f32.mrb[0].mxu0
    %v855 = vadd.f32 %v770, %v854
    %v856 = vpop.f32.mrb[0].mxu0
    %857 = vmatprep.mubr.f32.mxu0 0.0
    %858 = vmatmul.mubr.f32.gmra.mrb[0].mxu0 %v663
    %v859 = vpop.f32.mrb[0].mxu0
    %v860 = vadd.f32 %v775, %v859
    %v861 = vpop.f32.mrb[0].mxu0
    %862 = vmatprep.mubr.f32.mxu0 0.0
    %863 = vmatmul.mubr.f32.gmra.mrb[0].mxu0 %v664
    %v864 = vpop.f32.mrb[0].mxu0
    %v865 = vadd.f32 %v780, %v864
    %v866 = vpop.f32.mrb[0].mxu0
    %867 = vmatprep.mubr.f32.mxu0 0.0
    %868 = vmatmul.mubr.f32.gmra.mrb[0].mxu0 %v665
    %v869 = vpop.f32.mrb[0].mxu0
    %v870 = vadd.f32 %v785, %v869
    %v871 = vpop.f32.mrb[0].mxu0
    %872 = vdwg.mxu0
    %v873 = vld [vmem:[#allocation2 + $0x2] sm:$0xff]
    %v874 = vld [vmem:[#allocation2 + $0xa] sm:$0xff]
    %v875 = vld [vmem:[#allocation2 + $0x1a] sm:$0xff]
    %v876 = vld [vmem:[#allocation2 + $0x22] sm:$0xff]
    %s877 = scalar_lea.vmem [#allocation6], 256
    %v878 = vld [vmem:[%s877] sm:$0xff]
    %v879 = vld [vmem:[%s877 + $0x8] sm:$0xff]
    %v880 = vld [vmem:[%s877 + $0x10] sm:$0xff]
    %v881 = vld [vmem:[%s877 + $0x18] sm:$0xff]
    %v882 = vld [vmem:[%s877 + $0x20] sm:$0xff]
    %v883 = vld [vmem:[%s877 + $0x28] sm:$0xff]
    %v884 = vld [vmem:[%s877 + $0x30] sm:$0xff]
    %v885 = vld [vmem:[%s877 + $0x38] sm:$0xff]
    %v886 = vld [vmem:[%s877 + $0x40] sm:$0xff]
    %v887 = vld [vmem:[%s877 + $0x48] sm:$0xff]
    %v888 = vld [vmem:[%s877 + $0x50] sm:$0xff]
    %v889 = vld [vmem:[%s877 + $0x58] sm:$0xff]
    %v890 = vld [vmem:[%s877 + $0x60] sm:$0xff]
    %v891 = vld [vmem:[%s877 + $0x68] sm:$0xff]
    %v892 = vld [vmem:[%s877 + $0x70] sm:$0xff]
    %v893 = vld [vmem:[%s877 + $0x78] sm:$0xff]
    %894 = vmatprep.subr.mxu0 0.0
    %895 = vmatpush1.msra.mxu0 %v878
    %896 = vmatprep.subr.mxu0 0.0
    %897 = vmatpush1.msra.mxu0 %v879
    %898 = vmatprep.subr.mxu0 0.0
    %899 = vmatpush1.msra.mxu0 %v880
    %900 = vmatprep.subr.mxu0 0.0
    %901 = vmatpush1.msra.mxu0 %v881
    %902 = vmatprep.subr.mxu0 0.0
    %903 = vmatpush1.msra.mxu0 %v882
    %904 = vmatprep.subr.mxu0 0.0
    %905 = vmatpush1.msra.mxu0 %v883
    %906 = vmatprep.subr.mxu0 0.0
    %907 = vmatpush1.msra.mxu0 %v884
    %908 = vmatprep.subr.mxu0 0.0
    %909 = vmatpush1.msra.mxu0 %v885
    %910 = vmatprep.subr.mxu0 0.0
    %911 = vmatpush1.msra.mxu0 %v886
    %912 = vmatprep.subr.mxu0 0.0
    %913 = vmatpush1.msra.mxu0 %v887
    %914 = vmatprep.subr.mxu0 0.0
    %915 = vmatpush1.msra.mxu0 %v888
    %916 = vmatprep.subr.mxu0 0.0
    %917 = vmatpush1.msra.mxu0 %v889
    %918 = vmatprep.subr.mxu0 0.0
    %919 = vmatpush1.msra.mxu0 %v890
    %920 = vmatprep.subr.mxu0 0.0
    %921 = vmatpush1.msra.mxu0 %v891
    %922 = vmatprep.subr.mxu0 0.0
    %923 = vmatpush1.msra.mxu0 %v892
    %924 = vmatprep.subr.mxu0 0.0
    %925 = vmatpush1.msra.mxu0 %v893
    %926 = vmatprep.subr.mxu0 0.0
    %927 = vmatpush1.msra.mxu0 0.0
    %928 = vmatprep.subr.mxu0 0.0
    %929 = vmatpush1.msra.mxu0 0.0
    %930 = vmatprep.subr.mxu0 0.0
    %931 = vmatpush1.msra.mxu0 0.0
    %932 = vmatprep.subr.mxu0 0.0
    %933 = vmatpush1.msra.mxu0 0.0
    %934 = vmatprep.subr.mxu0 0.0
    %935 = vmatpush1.msra.mxu0 0.0
    %936 = vmatprep.subr.mxu0 0.0
    %937 = vmatpush1.msra.mxu0 0.0
    %938 = vmatprep.subr.mxu0 0.0
    %939 = vmatpush1.msra.mxu0 0.0
    %940 = vmatprep.subr.mxu0 0.0
    %941 = vmatpush1.msra.mxu0 0.0
    %942 = vmatprep.subr.mxu0 0.0
    %943 = vmatpush1.msra.mxu0 0.0
    %944 = vmatprep.subr.mxu0 0.0
    %945 = vmatpush1.msra.mxu0 0.0
    %946 = vmatprep.subr.mxu0 0.0
    %947 = vmatpush1.msra.mxu0 0.0
    %948 = vmatprep.subr.mxu0 0.0
    %949 = vmatpush1.msra.mxu0 0.0
    %950 = vmatprep.subr.mxu0 0.0
    %951 = vmatpush1.msra.mxu0 0.0
    %952 = vmatprep.subr.mxu0 0.0
    %953 = vmatpush1.msra.mxu0 0.0
    %954 = vmatprep.subr.mxu0 0.0
    %955 = vmatpush1.msra.mxu0 0.0
    %956 = vmatprep.subr.mxu0 0.0
    %957 = vmatpush1.msra.mxu0 0.0
    %958 = vmatprep.mubr.f32.mxu0 0.0
    %959 = vmatmul.mubr.f32.gmra.mrb[0].mxu0 %v873
    %v960 = vpop.f32.mrb[0].mxu0
    %v961 = vadd.f32 0.0, %v960
    %v962 = vpop.f32.mrb[0].mxu0
    %963 = vmatprep.mubr.f32.mxu0 0.0
    %964 = vmatmul.mubr.f32.gmra.mrb[0].mxu0 %v874
    %v965 = vpop.f32.mrb[0].mxu0
    %v966 = vadd.f32 0.0, %v965
    %v967 = vpop.f32.mrb[0].mxu0
    %968 = vmatprep.mubr.f32.mxu0 0.0
    %969 = vmatmul.mubr.f32.gmra.mrb[0].mxu0 %v875
    %v970 = vpop.f32.mrb[0].mxu0
    %v971 = vadd.f32 0.0, %v970
    %v972 = vpop.f32.mrb[0].mxu0
    %973 = vmatprep.mubr.f32.mxu0 0.0
    %974 = vmatmul.mubr.f32.gmra.mrb[0].mxu0 %v876
    %v975 = vpop.f32.mrb[0].mxu0
    %v976 = vadd.f32 0.0, %v975
    %v977 = vpop.f32.mrb[0].mxu0
    %978 = vdwg.mxu0
    %v979 = vadd.f32 %v855, %v961
    %v980 = vadd.f32 %v860, %v966
    %v981 = vadd.f32 %v865, %v971
    %v982 = vadd.f32 %v870, %v976
    %v983 = vld [vmem:[%s6] sm:$0x1]
    %v985 = vlaneseq
    %v986 = vshrl.u32 %v985, 7
    %v987 = vsub.s32 0, %v986
    %v988 = vrot.slane %v983, %v987
    %v990 = vadd.f32 %v979, %v988
    %v991 = vadd.f32 %v980, %v988
    %v992 = vadd.f32 %v981, %v988
    %v993 = vadd.f32 %v982, %v988
    %v994 = vadd.f32 %v990, %v991
    %v995 = vadd.f32 %v994, %v992
    %v996 = vadd.f32 %v995, %v993
    %v997 = vrot.slane %v996, 4
    %v998 = vadd.f32 %v996, %v997
    %v999 = vrot.slane %v998, 2
    %v1000 = vadd.f32 %v998, %v999
    %v1001 = vrot.slane %v1000, 1
    %v1002 = vadd.f32 %v1000, %v1001
    %v1003 = vld [vmem:[#allocation8] sm:$0xff]
    %v1004 = vld [vmem:[#allocation8 + $0x8] sm:$0xff]
    %v1005 = vld [vmem:[#allocation8 + $0x10] sm:$0xff]
    %v1006 = vld [vmem:[#allocation8 + $0x18] sm:$0xff]
    %v1007 = vld [vmem:[#allocation8 + $0x20] sm:$0xff]
    %v1008 = vld [vmem:[#allocation8 + $0x28] sm:$0xff]
    %v1009 = vld [vmem:[#allocation8 + $0x30] sm:$0xff]
    %v1010 = vld [vmem:[#allocation8 + $0x38] sm:$0xff]
    %v1011 = vld [vmem:[#allocation8 + $0x40] sm:$0xff]
    %v1012 = vld [vmem:[#allocation8 + $0x48] sm:$0xff]
    %v1013 = vld [vmem:[#allocation8 + $0x50] sm:$0xff]
    %v1014 = vld [vmem:[#allocation8 + $0x58] sm:$0xff]
    %v1015 = vld [vmem:[#allocation8 + $0x60] sm:$0xff]
    %v1016 = vld [vmem:[#allocation8 + $0x68] sm:$0xff]
    %v1017 = vld [vmem:[#allocation8 + $0x70] sm:$0xff]
    %v1018 = vld [vmem:[#allocation8 + $0x78] sm:$0xff]
    %1019 = vmatprep.subr.mxu0 0.0
    %1020 = vmatpush1.msra.mxu0 %v1003
    %1021 = vmatprep.subr.mxu0 0.0
    %1022 = vmatpush1.msra.mxu0 %v1004
    %1023 = vmatprep.subr.mxu0 0.0
    %1024 = vmatpush1.msra.mxu0 %v1005
    %1025 = vmatprep.subr.mxu0 0.0
    %1026 = vmatpush1.msra.mxu0 %v1006
    %1027 = vmatprep.subr.mxu0 0.0
    %1028 = vmatpush1.msra.mxu0 %v1007
    %1029 = vmatprep.subr.mxu0 0.0
    %1030 = vmatpush1.msra.mxu0 %v1008
    %1031 = vmatprep.subr.mxu0 0.0
    %1032 = vmatpush1.msra.mxu0 %v1009
    %1033 = vmatprep.subr.mxu0 0.0
    %1034 = vmatpush1.msra.mxu0 %v1010
    %1035 = vmatprep.subr.mxu0 0.0
    %1036 = vmatpush1.msra.mxu0 %v1011
    %1037 = vmatprep.subr.mxu0 0.0
    %1038 = vmatpush1.msra.mxu0 %v1012
    %1039 = vmatprep.subr.mxu0 0.0
    %1040 = vmatpush1.msra.mxu0 %v1013
    %1041 = vmatprep.subr.mxu0 0.0
    %1042 = vmatpush1.msra.mxu0 %v1014
    %1043 = vmatprep.subr.mxu0 0.0
    %1044 = vmatpush1.msra.mxu0 %v1015
    %1045 = vmatprep.subr.mxu0 0.0
    %1046 = vmatpush1.msra.mxu0 %v1016
    %1047 = vmatprep.subr.mxu0 0.0
    %1048 = vmatpush1.msra.mxu0 %v1017
    %1049 = vmatprep.subr.mxu0 0.0
    %1050 = vmatpush1.msra.mxu0 %v1018
    %1051 = vmatprep.subr.mxu0 0.0
    %1052 = vmatpush1.msra.mxu0 0.0
    %1053 = vmatprep.subr.mxu0 0.0
    %1054 = vmatpush1.msra.mxu0 0.0
    %1055 = vmatprep.subr.mxu0 0.0
    %1056 = vmatpush1.msra.mxu0 0.0
    %1057 = vmatprep.subr.mxu0 0.0
    %1058 = vmatpush1.msra.mxu0 0.0
    %1059 = vmatprep.subr.mxu0 0.0
    %1060 = vmatpush1.msra.mxu0 0.0
    %1061 = vmatprep.subr.mxu0 0.0
    %1062 = vmatpush1.msra.mxu0 0.0
    %1063 = vmatprep.subr.mxu0 0.0
    %1064 = vmatpush1.msra.mxu0 0.0
    %1065 = vmatprep.subr.mxu0 0.0
    %1066 = vmatpush1.msra.mxu0 0.0
    %1067 = vmatprep.subr.mxu0 0.0
    %1068 = vmatpush1.msra.mxu0 0.0
    %1069 = vmatprep.subr.mxu0 0.0
    %1070 = vmatpush1.msra.mxu0 0.0
    %1071 = vmatprep.subr.mxu0 0.0
    %1072 = vmatpush1.msra.mxu0 0.0
    %1073 = vmatprep.subr.mxu0 0.0
    %1074 = vmatpush1.msra.mxu0 0.0
    %1075 = vmatprep.subr.mxu0 0.0
    %1076 = vmatpush1.msra.mxu0 0.0
    %1077 = vmatprep.subr.mxu0 0.0
    %1078 = vmatpush1.msra.mxu0 0.0
    %1079 = vmatprep.subr.mxu0 0.0
    %1080 = vmatpush1.msra.mxu0 0.0
    %1081 = vmatprep.subr.mxu0 0.0
    %1082 = vmatpush1.msra.mxu0 0.0
    %1083 = vmatprep.mubr.f32.mxu0 0.0
    %1084 = vmatmul.mubr.f32.gmra.mrb[0].mxu0 %v1002
    %v1085 = vpop.f32.mrb[0].mxu0
    %v1086 = vadd.f32 0.0, %v1085
    %v1087 = vpop.f32.mrb[0].mxu0
    %1088 = vdwg.mxu0
    %v1089 = vmul.f32 %v1086, 0.001953125
    %v1090 = vlaneseq
    %v1091 = vshrl.u32 %v1090, 7
    %v1092 = vsub.s32 0, %v1091
    %v1093 = vrot.slane %v1089, %v1092
    %v1094 = vsub.f32 %v990, %v1093
    %v1095 = vsub.f32 %v991, %v1093
    %v1096 = vsub.f32 %v992, %v1093
    %v1097 = vsub.f32 %v993, %v1093
    %v1098 = vmul.f32 %v1094, %v1094
    %v1099 = vmul.f32 %v1095, %v1095
    %v1100 = vmul.f32 %v1096, %v1096
    %v1101 = vmul.f32 %v1097, %v1097
    %v1102 = vadd.f32 %v1098, %v1099
    %v1103 = vadd.f32 %v1102, %v1100
    %v1104 = vadd.f32 %v1103, %v1101
    %v1105 = vrot.slane %v1104, 4
    %v1106 = vadd.f32 %v1104, %v1105
    %v1107 = vrot.slane %v1106, 2
    %v1108 = vadd.f32 %v1106, %v1107
    %v1109 = vrot.slane %v1108, 1
    %v1110 = vadd.f32 %v1108, %v1109
    %1111 = vmatprep.subr.mxu0 0.0
    %1112 = vmatpush1.msra.mxu0 %v1003
    %1113 = vmatprep.subr.mxu0 0.0
    %1114 = vmatpush1.msra.mxu0 %v1004
    %1115 = vmatprep.subr.mxu0 0.0
    %1116 = vmatpush1.msra.mxu0 %v1005
    %1117 = vmatprep.subr.mxu0 0.0
    %1118 = vmatpush1.msra.mxu0 %v1006
    %1119 = vmatprep.subr.mxu0 0.0
    %1120 = vmatpush1.msra.mxu0 %v1007
    %1121 = vmatprep.subr.mxu0 0.0
    %1122 = vmatpush1.msra.mxu0 %v1008
    %1123 = vmatprep.subr.mxu0 0.0
    %1124 = vmatpush1.msra.mxu0 %v1009
    %1125 = vmatprep.subr.mxu0 0.0
    %1126 = vmatpush1.msra.mxu0 %v1010
    %1127 = vmatprep.subr.mxu0 0.0
    %1128 = vmatpush1.msra.mxu0 %v1011
    %1129 = vmatprep.subr.mxu0 0.0
    %1130 = vmatpush1.msra.mxu0 %v1012
    %1131 = vmatprep.subr.mxu0 0.0
    %1132 = vmatpush1.msra.mxu0 %v1013
    %1133 = vmatprep.subr.mxu0 0.0
    %1134 = vmatpush1.msra.mxu0 %v1014
    %1135 = vmatprep.subr.mxu0 0.0
    %1136 = vmatpush1.msra.mxu0 %v1015
    %1137 = vmatprep.subr.mxu0 0.0
    %1138 = vmatpush1.msra.mxu0 %v1016
    %1139 = vmatprep.subr.mxu0 0.0
    %1140 = vmatpush1.msra.mxu0 %v1017
    %1141 = vmatprep.subr.mxu0 0.0
    %1142 = vmatpush1.msra.mxu0 %v1018
    %1143 = vmatprep.subr.mxu0 0.0
    %1144 = vmatpush1.msra.mxu0 0.0
    %1145 = vmatprep.subr.mxu0 0.0
    %1146 = vmatpush1.msra.mxu0 0.0
    %1147 = vmatprep.subr.mxu0 0.0
    %1148 = vmatpush1.msra.mxu0 0.0
    %1149 = vmatprep.subr.mxu0 0.0
    %1150 = vmatpush1.msra.mxu0 0.0
    %1151 = vmatprep.subr.mxu0 0.0
    %1152 = vmatpush1.msra.mxu0 0.0
    %1153 = vmatprep.subr.mxu0 0.0
    %1154 = vmatpush1.msra.mxu0 0.0
    %1155 = vmatprep.subr.mxu0 0.0
    %1156 = vmatpush1.msra.mxu0 0.0
    %1157 = vmatprep.subr.mxu0 0.0
    %1158 = vmatpush1.msra.mxu0 0.0
    %1159 = vmatprep.subr.mxu0 0.0
    %1160 = vmatpush1.msra.mxu0 0.0
    %1161 = vmatprep.subr.mxu0 0.0
    %1162 = vmatpush1.msra.mxu0 0.0
    %1163 = vmatprep.subr.mxu0 0.0
    %1164 = vmatpush1.msra.mxu0 0.0
    %1165 = vmatprep.subr.mxu0 0.0
    %1166 = vmatpush1.msra.mxu0 0.0
    %1167 = vmatprep.subr.mxu0 0.0
    %1168 = vmatpush1.msra.mxu0 0.0
    %1169 = vmatprep.subr.mxu0 0.0
    %1170 = vmatpush1.msra.mxu0 0.0
    %1171 = vmatprep.subr.mxu0 0.0
    %1172 = vmatpush1.msra.mxu0 0.0
    %1173 = vmatprep.subr.mxu0 0.0
    %1174 = vmatpush1.msra.mxu0 0.0
    %1175 = vmatprep.mubr.f32.mxu0 0.0
    %1176 = vmatmul.mubr.f32.gmra.mrb[0].mxu0 %v1110
    %v1177 = vpop.f32.mrb[0].mxu0
    %v1178 = vadd.f32 0.0, %v1177
    %v1179 = vpop.f32.mrb[0].mxu0
    %1180 = vdwg.mxu0
    %v1181 = vmul.f32 %v1178, 0.001953125
    %v1182 = vadd.f32 %v1181, 1e-05
    %v1183 = vrsqrt.pop %v1182
    %v1184 = vlaneseq
    %v1185 = vshrl.u32 %v1184, 7
    %v1186 = vsub.s32 0, %v1185
    %v1187 = vrot.slane %v1183, %v1186
    %v1188 = vmul.f32 %v1094, %v1187
    %v1189 = vmul.f32 %v1095, %v1187
    %v1190 = vmul.f32 %v1096, %v1187
    %v1191 = vmul.f32 %v1097, %v1187
    %v1192 = vld [vmem:[%s7] sm:$0x1]
    %v1194 = vlaneseq
    %v1195 = vshrl.u32 %v1194, 7
    %v1196 = vsub.s32 0, %v1195
    %v1197 = vrot.slane %v1192, %v1196
    %v1199 = vmul.f32 %v1188, %v1197
    %v1200 = vmul.f32 %v1189, %v1197
    %v1201 = vmul.f32 %v1190, %v1197
    %v1202 = vmul.f32 %v1191, %v1197
    %v1203 = vld [vmem:[%s8] sm:$0x1]
    %v1205 = vlaneseq
    %v1206 = vshrl.u32 %v1205, 7
    %v1207 = vsub.s32 0, %v1206
    %v1208 = vrot.slane %v1203, %v1207
    %v1210 = vadd.f32 %v1199, %v1208
    %v1211 = vadd.f32 %v1200, %v1208
    %v1212 = vadd.f32 %v1201, %v1208
    %v1213 = vadd.f32 %v1202, %v1208
    %vm1214 = vcmp.gt.f32.partialorder %v1210, 0.0
    %vm1215 = vcmp.gt.f32.partialorder %v1211, 0.0
    %vm1216 = vcmp.gt.f32.partialorder %v1212, 0.0
    %vm1217 = vcmp.gt.f32.partialorder %v1213, 0.0
    %v1218 = vmul.f32 %v1210, 0.01
    %v1219 = vmul.f32 %v1211, 0.01
    %v1220 = vmul.f32 %v1212, 0.01
    %v1221 = vmul.f32 %v1213, 0.01
    %v1222 = vsel %vm1214, %v1210, %v1218
    %v1223 = vsel %vm1215, %v1211, %v1219
    %v1224 = vsel %vm1216, %v1212, %v1220
    %v1225 = vsel %vm1217, %v1213, %v1221
    %1226 = vst [vmem:[#allocation9] sm:$0xff] %v1222
    %1227 = vst [vmem:[#allocation9 + $0x8] sm:$0xff] %v1223
    %1228 = vst [vmem:[#allocation9 + $0x10] sm:$0xff] %v1224
    %1229 = vst [vmem:[#allocation9 + $0x18] sm:$0xff] %v1225
    // Predicated region
    $region54: #{tpu_custom_call.1} parent=1 // pred_check
      _
    $region55: #{tpu_custom_call.1} parent=1 // pred_check_branch
      %1231 = sbr.rel (0) target = $region57
    $region56: #{tpu_custom_call.1} parent=1 // pred_region
      %s1233 = ssub.s32 512, 512
      %1234 = vsyncadd [#allocation5], %s1233
      %s1235 = sshll.u32 [#allocation9], 4
      %s1236 = int_to_ptr.vmem [resolvable:$true] %s1235
      %1241 = dma.vmem_to_hbm [thread:$0]  %s1236, 512, %s10, [#allocation5], 128, 128, 8
    $region57: #{tpu_custom_call.1} parent=1 // pred_fallthru
      _
    // Predicated region
    $region58: #{tpu_custom_call.1} parent=1 // pred_check
      _
    $region59: #{tpu_custom_call.1} parent=1 // pred_check_branch
      %1243 = sbr.rel (0) target = $region61
    $region60: #{tpu_custom_call.1} parent=1 // pred_region
      %1244 = dma.done [#allocation5], 512
    $region61: #{tpu_custom_call.1} parent=1 // pred_fallthru
      _
    %1245 = vsyncpa [#allocation4], 1
    %1246 = vsyncpa [#allocation7], 1
    %1247 = vsyncpa [#allocation5], 1

</llo_original>
